<compile_context>
chip_gen: v7x
topology: tpu7x:2x2x1
jax: 0.10.0
libtpu: 0.0.40
codegen_flags: <defaults>
</compile_context>

<pallas_src>
import jax
import jax.numpy as jnp
from jax import lax
from jax.experimental import pallas as pl
from jax.experimental.pallas import tpu as pltpu

H, W = 4, 4
HW = H * W


def first_gen_block_kernel(
    x0_ref,            # (1, 16, C)   const + bias (batch-independent, resident)
    n1_ref, n2_ref,    # (Bt, 16, 1)  per-pixel noise maps for block 1 / 2
    nw1_ref, nw2_ref,  # (1, C)       per-channel noise scales
    s1_ref, s2_ref,    # (Bt, 1, L)   latents[:, 0] / latents[:, 1]
    sw1_ref, sb1_ref,  # (L, 2C), (1, 2C)  StyleMod 1 weight / bias (pre-scaled)
    sw2_ref, sb2_ref,  # (L, 2C), (1, 2C)  StyleMod 2 weight / bias
    cw_ref,            # (9*C, C) bf16  equalized conv weight, im2col layout (pre-scaled)
    cb_ref,            # (1, C)       conv bias
    out_ref,           # (Bt, 16, C)
):
    Bt, _, C = out_ref.shape
    L = sw1_ref.shape[0]

    def noise_lrelu_norm_style(x, noise_ref, nw_ref, s_ref, sw_ref, sb_ref):
        # PerChannelNoise: x + weight[c] * noise (noise broadcast over channels).
        x = x + noise_ref[...] * nw_ref[...].reshape(1, 1, C)
        # LeakyReLU(0.2): single VPU max.
        x = jnp.maximum(x, 0.2 * x)
        # InstanceNorm2d(affine=False): per-(sample, channel) over the 16
        # spatial positions, biased variance, eps inside rsqrt. Single-pass.
        mean = jnp.mean(x, axis=1, keepdims=True)            # (Bt, 1, C)
        msq = jnp.mean(x * x, axis=1, keepdims=True)
        var = msq - mean * mean
        x = (x - mean) * lax.rsqrt(var + 1e-5)
        # StyleMod: one (Bt,L)@(L,2C) dot, split at lane offset C (tile-aligned).
        s = s_ref[...].reshape(Bt, L)
        y = jnp.dot(s, sw_ref[...], preferred_element_type=jnp.float32) + sb_ref[...]
        ys = y[:, :C].reshape(Bt, 1, C)
        yb = y[:, C:].reshape(Bt, 1, C)
        return x * (ys + 1.0) + yb

    # x0 is (1,16,C); broadcast over Bt happens inside the first add.
    x = noise_lrelu_norm_style(x0_ref[...], n1_ref, nw1_ref,
                               s1_ref, sw1_ref, sb1_ref)

    # EqualizedLRConv2d(C, C, 3, padding=1) as a single im2col matmul.
    # Zero-halo built in-register; 9 shifted static slices concatenated on the
    # lane axis -> (Bt*16, 9C) patch matrix, cast to bf16 and multiplied once
    # against the bf16 (9C, C) weight on the MXU (f32 accumulation).
    x4 = x.reshape(Bt, H, W, C)
    zrow = jnp.zeros((Bt, 1, W, C), jnp.float32)
    xp = jnp.concatenate([zrow, x4, zrow], axis=1)           # (Bt, H+2, W,   C)
    zcol = jnp.zeros((Bt, H + 2, 1, C), jnp.float32)
    xp = jnp.concatenate([zcol, xp, zcol], axis=2)           # (Bt, H+2, W+2, C)
    patches = [xp[:, dy:dy + H, dx:dx + W, :]
               for dy in range(3) for dx in range(3)]
    im2col = jnp.concatenate(patches, axis=-1).reshape(Bt * HW, 9 * C)
    y = jnp.dot(im2col.astype(jnp.bfloat16), cw_ref[...],
                preferred_element_type=jnp.float32)
    x = y.reshape(Bt, HW, C) + cb_ref[...].reshape(1, 1, C)

    x = noise_lrelu_norm_style(x, n2_ref, nw2_ref, s2_ref, sw2_ref, sb2_ref)
    out_ref[...] = x


class FirstGenBlockStyleGanPallas:
    """Deterministically-initialized JAX/Pallas port of FirstGenBlockStyleGan."""

    def __init__(self, nb_channels, latent_size, key):
        C, L = nb_channels, latent_size
        self.C, self.L = C, L
        k = jax.random.split(key, 5)

        # nn.Parameter(torch.ones(1, C, 4, 4)) and nn.Parameter(torch.ones(C)).
        self.const_input = jnp.ones((1, C, 4, 4), jnp.float32)
        self.bias = jnp.ones((C,), jnp.float32)

        # PerChannelNoise weights (standard StyleGAN inits these to zero; small
        # random so the noise path contributes in this synthetic test).
        self.noise_w1 = 0.1 * jax.random.normal(k[0], (C,), jnp.float32)
        self.noise_w2 = 0.1 * jax.random.normal(k[1], (C,), jnp.float32)

        # StyleMod equalized-LR linear: latent -> 2*C, runtime scale 1/sqrt(L),
        # kept as a single (L, 2C) matrix: columns [0:C] = scale, [C:2C] = shift.
        s_scale = 1.0 / float(L) ** 0.5
        self.style_w1 = jax.random.normal(k[2], (L, 2 * C), jnp.float32) * s_scale
        self.style_w2 = jax.random.normal(k[3], (L, 2 * C), jnp.float32) * s_scale
        self.style_b1 = jnp.zeros((1, 2 * C), jnp.float32)
        self.style_b2 = jnp.zeros((1, 2 * C), jnp.float32)

        # EqualizedLRConv2d(C, C, 3, padding=1): stored weight ~ N(0,1),
        # runtime scale sqrt(2/(Cin*9)), bias 0. Reshaped to im2col layout
        # (kh*kw*Cin, Cout) and stored bf16 (MXU operand); f32 accumulation.
        c_scale = (2.0 / (C * 9)) ** 0.5
        w = jax.random.normal(k[4], (C, C, 3, 3), jnp.float32) * c_scale  # (Co,Ci,kh,kw)
        self.conv_w = (jnp.transpose(w, (2, 3, 1, 0))
                       .reshape(9 * C, C).astype(jnp.bfloat16))           # (9*Ci, Co)
        self.conv_b = jnp.zeros((1, C), jnp.float32)

    @staticmethod
    def _pick_bt(B):
        divs = [d for d in range(1, B + 1) if B % d == 0]
        # Prefer >=2 grid steps (so v7x's 2nd TensorCore gets work) while
        # keeping M = Bt*16 <= 256 (fills the 256-wide MXU on v6e/v7x).
        cand = [d for d in divs if d <= 16 and B // d >= 2]
        if cand:
            return max(cand)
        return max(d for d in divs if d <= 16)

    def __call__(self, latents, per_channel_noise=None, noise_key=None):
        # latents: (B, 2, L); per_channel_noise: (B, 2, 1, 4, 4) NCHW noise maps.
        B = latents.shape[0]
        C, L = self.C, self.L

        if per_channel_noise is None:
            # TODO(synk): torch uses fresh torch.randn per call; a fixed PRNGKey
            # is deterministic across calls unless the caller passes noise_key.
            if noise_key is None:
                noise_key = jax.random.PRNGKey(1234)
            per_channel_noise = jax.random.normal(
                noise_key, (B, 2, 1, H, W), jnp.float32)

        # const_input + bias.view(1,-1,1,1): batch-independent, flattened NHWC.
        x0_nchw = self.const_input + self.bias.reshape(1, C, 1, 1)       # (1,C,4,4)
        x0 = jnp.transpose(x0_nchw, (0, 2, 3, 1)).reshape(1, HW, C)      # (1,16,C)
        # Single-channel noise maps: NCHW (B,1,4,4) -> flattened (B,16,1).
        n1 = per_channel_noise[:, 0].reshape(B, HW, 1)
        n2 = per_channel_noise[:, 1].reshape(B, HW, 1)
        s1 = latents[:, 0:1, :]                                          # (B,1,L)
        s2 = latents[:, 1:2, :]

        Bt = self._pick_bt(B)
        grid = (B // Bt,)

        rep = lambda shape: pl.BlockSpec(shape, lambda i: (0,) * len(shape))
        batched = lambda shape: pl.BlockSpec(shape, lambda i: (i,) + (0,) * (len(shape) - 1))

        out_flat = pl.pallas_call(
            first_gen_block_kernel,
            out_shape=jax.ShapeDtypeStruct((B, HW, C), jnp.float32),
            grid=grid,
            in_specs=[
                rep((1, HW, C)),                                  # x0 (resident)
                batched((Bt, HW, 1)), batched((Bt, HW, 1)),       # n1, n2
                rep((1, C)), rep((1, C)),                         # noise weights
                batched((Bt, 1, L)), batched((Bt, 1, L)),         # s1, s2
                rep((L, 2 * C)), rep((1, 2 * C)),                 # style w1 / b1
                rep((L, 2 * C)), rep((1, 2 * C)),                 # style w2 / b2
                rep((9 * C, C)), rep((1, C)),                     # conv weight / bias
            ],
            out_specs=batched((Bt, HW, C)),
            compiler_params=pltpu.CompilerParams(
                dimension_semantics=("parallel",),
                vmem_limit_bytes=32 * 1024 * 1024),
        )(x0, n1, n2,
          self.noise_w1.reshape(1, C), self.noise_w2.reshape(1, C),
          s1, s2,
          self.style_w1, self.style_b1,
          self.style_w2, self.style_b2,
          self.conv_w, self.conv_b)

        # (B,16,C) -> (B,4,4,C) -> NCHW.
        return jnp.transpose(out_flat.reshape(B, H, W, C), (0, 3, 1, 2))


if __name__ == "__main__":
    # C chosen as a multiple of 128 so the channel axis is lane-dense
    # (typical StyleGAN first block uses C=512).
    B, C, L = 2, 128, 64
    key = jax.random.PRNGKey(0)
    k_params, k_lat, k_noise = jax.random.split(key, 3)

    block = FirstGenBlockStyleGanPallas(nb_channels=C, latent_size=L, key=k_params)

    latents = jax.random.normal(k_lat, (B, 2, L), jnp.float32)
    per_channel_noise = jax.random.normal(k_noise, (B, 2, 1, H, W), jnp.float32)

    out = block(latents, per_channel_noise)
    out = jax.block_until_ready(out)
    assert out.shape == (B, C, H, W), out.shape
    assert bool(jnp.all(jnp.isfinite(out)))
    print("KERNEL_OK")
</pallas_src>

<mosaic_0001>
module attributes {stable_mosaic.version = 11 : i64} {
  func.func @first_gen_block_kernel(%arg0: i32, %arg1: memref<1x16x128xf32, #tpu.memory_space<vmem>>, %arg2: memref<1x16x1xf32, #tpu.memory_space<vmem>>, %arg3: memref<1x16x1xf32, #tpu.memory_space<vmem>>, %arg4: memref<1x128xf32, #tpu.memory_space<vmem>>, %arg5: memref<1x128xf32, #tpu.memory_space<vmem>>, %arg6: memref<1x1x64xf32, #tpu.memory_space<vmem>>, %arg7: memref<1x1x64xf32, #tpu.memory_space<vmem>>, %arg8: memref<64x256xf32, #tpu.memory_space<vmem>>, %arg9: memref<1x256xf32, #tpu.memory_space<vmem>>, %arg10: memref<64x256xf32, #tpu.memory_space<vmem>>, %arg11: memref<1x256xf32, #tpu.memory_space<vmem>>, %arg12: memref<1152x128xbf16, #tpu.memory_space<vmem>>, %arg13: memref<1x128xf32, #tpu.memory_space<vmem>>, %arg14: memref<1x16x128xf32, #tpu.memory_space<vmem>>) attributes {dimension_semantics = [#tpu.dimension_semantics<parallel>], iteration_bounds = array<i64: 2>, scalar_prefetch = 0 : i64, scratch_operands = 0 : i64, tpu.core_type = #tpu.core_type<tc>, window_params = [{pipeline_mode = #tpu.pipeline_mode<synchronous>, transform_indices = @transform_0, window_bounds = array<i64: 1, 16, 128>}, {transform_indices = @transform_1, window_bounds = array<i64: 1, 16, 1>}, {transform_indices = @transform_2, window_bounds = array<i64: 1, 16, 1>}, {pipeline_mode = #tpu.pipeline_mode<synchronous>, transform_indices = @transform_3, window_bounds = array<i64: 1, 128>}, {pipeline_mode = #tpu.pipeline_mode<synchronous>, transform_indices = @transform_4, window_bounds = array<i64: 1, 128>}, {transform_indices = @transform_5, window_bounds = array<i64: 1, 1, 64>}, {transform_indices = @transform_6, window_bounds = array<i64: 1, 1, 64>}, {pipeline_mode = #tpu.pipeline_mode<synchronous>, transform_indices = @transform_7, window_bounds = array<i64: 64, 256>}, {pipeline_mode = #tpu.pipeline_mode<synchronous>, transform_indices = @transform_8, window_bounds = array<i64: 1, 256>}, {pipeline_mode = #tpu.pipeline_mode<synchronous>, transform_indices = @transform_9, window_bounds = array<i64: 64, 256>}, {pipeline_mode = #tpu.pipeline_mode<synchronous>, transform_indices = @transform_10, window_bounds = array<i64: 1, 256>}, {pipeline_mode = #tpu.pipeline_mode<synchronous>, transform_indices = @transform_11, window_bounds = array<i64: 1152, 128>}, {pipeline_mode = #tpu.pipeline_mode<synchronous>, transform_indices = @transform_12, window_bounds = array<i64: 1, 128>}, {transform_indices = @transform_13, window_bounds = array<i64: 1, 16, 128>}]} {
    %c0 = arith.constant 0 : index
    %c0_0 = arith.constant 0 : index
    %c0_1 = arith.constant 0 : index
    %0 = vector.load %arg1[%c0, %c0_0, %c0_1] : memref<1x16x128xf32, #tpu.memory_space<vmem>>, vector<1x16x128xf32>
    %c0_2 = arith.constant 0 : index
    %c0_3 = arith.constant 0 : index
    %c0_4 = arith.constant 0 : index
    %1 = vector.load %arg2[%c0_2, %c0_3, %c0_4] : memref<1x16x1xf32, #tpu.memory_space<vmem>>, vector<1x16x1xf32>
    %c0_5 = arith.constant 0 : index
    %c0_6 = arith.constant 0 : index
    %2 = vector.load %arg4[%c0_5, %c0_6] : memref<1x128xf32, #tpu.memory_space<vmem>>, vector<1x128xf32>
    %3 = vector.shape_cast %2 : vector<1x128xf32> to vector<1x1x128xf32>
    %4 = vector.broadcast %1 : vector<1x16x1xf32> to vector<1x16x128xf32>
    %5 = vector.broadcast %3 : vector<1x1x128xf32> to vector<1x16x128xf32>
    %6 = arith.mulf %4, %5 : vector<1x16x128xf32>
    %7 = arith.addf %0, %6 : vector<1x16x128xf32>
    %cst = arith.constant 2.000000e-01 : f32
    %8 = vector.broadcast %cst : f32 to vector<1x16x128xf32>
    %9 = arith.mulf %8, %7 : vector<1x16x128xf32>
    %10 = arith.maximumf %7, %9 : vector<1x16x128xf32>
    %cst_7 = arith.constant dense<0.000000e+00> : vector<1x128xf32>
    %11 = vector.multi_reduction <add>, %10, %cst_7 [1] : vector<1x16x128xf32> to vector<1x128xf32>
    %12 = vector.shape_cast %11 : vector<1x128xf32> to vector<1x1x128xf32>
    %cst_8 = arith.constant 1.600000e+01 : f32
    %13 = vector.broadcast %cst_8 : f32 to vector<1x1x128xf32>
    %14 = arith.divf %12, %13 : vector<1x1x128xf32>
    %15 = arith.mulf %10, %10 : vector<1x16x128xf32>
    %cst_9 = arith.constant dense<0.000000e+00> : vector<1x128xf32>
    %16 = vector.multi_reduction <add>, %15, %cst_9 [1] : vector<1x16x128xf32> to vector<1x128xf32>
    %17 = vector.shape_cast %16 : vector<1x128xf32> to vector<1x1x128xf32>
    %cst_10 = arith.constant 1.600000e+01 : f32
    %18 = vector.broadcast %cst_10 : f32 to vector<1x1x128xf32>
    %19 = arith.divf %17, %18 : vector<1x1x128xf32>
    %20 = arith.mulf %14, %14 : vector<1x1x128xf32>
    %21 = arith.subf %19, %20 : vector<1x1x128xf32>
    %22 = vector.broadcast %14 : vector<1x1x128xf32> to vector<1x16x128xf32>
    %23 = arith.subf %10, %22 : vector<1x16x128xf32>
    %cst_11 = arith.constant 9.99999974E-6 : f32
    %24 = vector.broadcast %cst_11 : f32 to vector<1x1x128xf32>
    %25 = arith.addf %21, %24 : vector<1x1x128xf32>
    %26 = math.rsqrt %25 : vector<1x1x128xf32>
    %27 = vector.broadcast %26 : vector<1x1x128xf32> to vector<1x16x128xf32>
    %28 = arith.mulf %23, %27 : vector<1x16x128xf32>
    %c0_12 = arith.constant 0 : index
    %c0_13 = arith.constant 0 : index
    %c0_14 = arith.constant 0 : index
    %29 = vector.load %arg6[%c0_12, %c0_13, %c0_14] : memref<1x1x64xf32, #tpu.memory_space<vmem>>, vector<1x1x64xf32>
    %30 = vector.shape_cast %29 : vector<1x1x64xf32> to vector<1x64xf32>
    %c0_15 = arith.constant 0 : index
    %c0_16 = arith.constant 0 : index
    %31 = vector.load %arg8[%c0_15, %c0_16] : memref<64x256xf32, #tpu.memory_space<vmem>>, vector<64x256xf32>
    %cst_17 = arith.constant dense<0.000000e+00> : vector<1x256xf32>
    %32 = tpu.matmul %30, %31, %cst_17 {dimension_numbers = #tpu.dot_dimension_numbers<[1], [0], [0], [1], [0, 0, 1, 1], [], []>} : vector<1x64xf32>, vector<64x256xf32>, vector<1x256xf32> -> vector<1x256xf32>
    %c0_18 = arith.constant 0 : index
    %c0_19 = arith.constant 0 : index
    %33 = vector.load %arg9[%c0_18, %c0_19] : memref<1x256xf32, #tpu.memory_space<vmem>>, vector<1x256xf32>
    %34 = arith.addf %32, %33 : vector<1x256xf32>
    %35 = vector.extract_strided_slice %34 {offsets = [0, 0], sizes = [1, 128], strides = [1, 1]} : vector<1x256xf32> to vector<1x128xf32>
    %36 = vector.shape_cast %35 : vector<1x128xf32> to vector<1x1x128xf32>
    %37 = vector.extract_strided_slice %34 {offsets = [0, 128], sizes = [1, 128], strides = [1, 1]} : vector<1x256xf32> to vector<1x128xf32>
    %38 = vector.shape_cast %37 : vector<1x128xf32> to vector<1x1x128xf32>
    %cst_20 = arith.constant 1.000000e+00 : f32
    %39 = vector.broadcast %cst_20 : f32 to vector<1x1x128xf32>
    %40 = arith.addf %36, %39 : vector<1x1x128xf32>
    %41 = vector.broadcast %40 : vector<1x1x128xf32> to vector<1x16x128xf32>
    %42 = arith.mulf %28, %41 : vector<1x16x128xf32>
    %43 = vector.broadcast %38 : vector<1x1x128xf32> to vector<1x16x128xf32>
    %44 = arith.addf %42, %43 : vector<1x16x128xf32>
    %45 = vector.shape_cast %44 : vector<1x16x128xf32> to vector<1x4x4x128xf32>
    %cst_21 = arith.constant 0.000000e+00 : f32
    %46 = vector.broadcast %cst_21 : f32 to vector<1x1x4x128xf32>
    %47 = tpu.concatenate %46, %45, %46 in 1 : vector<1x1x4x128xf32>, vector<1x4x4x128xf32>, vector<1x1x4x128xf32> -> vector<1x6x4x128xf32>
    %cst_22 = arith.constant 0.000000e+00 : f32
    %48 = vector.broadcast %cst_22 : f32 to vector<1x6x1x128xf32>
    %49 = tpu.concatenate %48, %47, %48 in 2 : vector<1x6x1x128xf32>, vector<1x6x4x128xf32>, vector<1x6x1x128xf32> -> vector<1x6x6x128xf32>
    %50 = vector.extract_strided_slice %49 {offsets = [0, 0, 0, 0], sizes = [1, 4, 4, 128], strides = [1, 1, 1, 1]} : vector<1x6x6x128xf32> to vector<1x4x4x128xf32>
    %51 = vector.extract_strided_slice %49 {offsets = [0, 0, 1, 0], sizes = [1, 4, 4, 128], strides = [1, 1, 1, 1]} : vector<1x6x6x128xf32> to vector<1x4x4x128xf32>
    %52 = vector.extract_strided_slice %49 {offsets = [0, 0, 2, 0], sizes = [1, 4, 4, 128], strides = [1, 1, 1, 1]} : vector<1x6x6x128xf32> to vector<1x4x4x128xf32>
    %53 = vector.extract_strided_slice %49 {offsets = [0, 1, 0, 0], sizes = [1, 4, 4, 128], strides = [1, 1, 1, 1]} : vector<1x6x6x128xf32> to vector<1x4x4x128xf32>
    %54 = vector.extract_strided_slice %49 {offsets = [0, 1, 1, 0], sizes = [1, 4, 4, 128], strides = [1, 1, 1, 1]} : vector<1x6x6x128xf32> to vector<1x4x4x128xf32>
    %55 = vector.extract_strided_slice %49 {offsets = [0, 1, 2, 0], sizes = [1, 4, 4, 128], strides = [1, 1, 1, 1]} : vector<1x6x6x128xf32> to vector<1x4x4x128xf32>
    %56 = vector.extract_strided_slice %49 {offsets = [0, 2, 0, 0], sizes = [1, 4, 4, 128], strides = [1, 1, 1, 1]} : vector<1x6x6x128xf32> to vector<1x4x4x128xf32>
    %57 = vector.extract_strided_slice %49 {offsets = [0, 2, 1, 0], sizes = [1, 4, 4, 128], strides = [1, 1, 1, 1]} : vector<1x6x6x128xf32> to vector<1x4x4x128xf32>
    %58 = vector.extract_strided_slice %49 {offsets = [0, 2, 2, 0], sizes = [1, 4, 4, 128], strides = [1, 1, 1, 1]} : vector<1x6x6x128xf32> to vector<1x4x4x128xf32>
    %59 = tpu.concatenate %50, %51, %52, %53, %54, %55, %56, %57, %58 in 3 : vector<1x4x4x128xf32>, vector<1x4x4x128xf32>, vector<1x4x4x128xf32>, vector<1x4x4x128xf32>, vector<1x4x4x128xf32>, vector<1x4x4x128xf32>, vector<1x4x4x128xf32>, vector<1x4x4x128xf32>, vector<1x4x4x128xf32> -> vector<1x4x4x1152xf32>
    %60 = vector.shape_cast %59 : vector<1x4x4x1152xf32> to vector<16x1152xf32>
    %61 = arith.truncf %60 : vector<16x1152xf32> to vector<16x1152xbf16>
    %c0_23 = arith.constant 0 : index
    %c0_24 = arith.constant 0 : index
    %62 = vector.load %arg12[%c0_23, %c0_24] : memref<1152x128xbf16, #tpu.memory_space<vmem>>, vector<1152x128xbf16>
    %cst_25 = arith.constant dense<0.000000e+00> : vector<16x128xf32>
    %63 = tpu.matmul %61, %62, %cst_25 {dimension_numbers = #tpu.dot_dimension_numbers<[1], [0], [0], [1], [0, 0, 1, 1], [], []>} : vector<16x1152xbf16>, vector<1152x128xbf16>, vector<16x128xf32> -> vector<16x128xf32>
    %64 = vector.shape_cast %63 : vector<16x128xf32> to vector<1x16x128xf32>
    %c0_26 = arith.constant 0 : index
    %c0_27 = arith.constant 0 : index
    %65 = vector.load %arg13[%c0_26, %c0_27] : memref<1x128xf32, #tpu.memory_space<vmem>>, vector<1x128xf32>
    %66 = vector.shape_cast %65 : vector<1x128xf32> to vector<1x1x128xf32>
    %67 = vector.broadcast %66 : vector<1x1x128xf32> to vector<1x16x128xf32>
    %68 = arith.addf %64, %67 : vector<1x16x128xf32>
    %c0_28 = arith.constant 0 : index
    %c0_29 = arith.constant 0 : index
    %c0_30 = arith.constant 0 : index
    %69 = vector.load %arg3[%c0_28, %c0_29, %c0_30] : memref<1x16x1xf32, #tpu.memory_space<vmem>>, vector<1x16x1xf32>
    %c0_31 = arith.constant 0 : index
    %c0_32 = arith.constant 0 : index
    %70 = vector.load %arg5[%c0_31, %c0_32] : memref<1x128xf32, #tpu.memory_space<vmem>>, vector<1x128xf32>
    %71 = vector.shape_cast %70 : vector<1x128xf32> to vector<1x1x128xf32>
    %72 = vector.broadcast %69 : vector<1x16x1xf32> to vector<1x16x128xf32>
    %73 = vector.broadcast %71 : vector<1x1x128xf32> to vector<1x16x128xf32>
    %74 = arith.mulf %72, %73 : vector<1x16x128xf32>
    %75 = arith.addf %68, %74 : vector<1x16x128xf32>
    %cst_33 = arith.constant 2.000000e-01 : f32
    %76 = vector.broadcast %cst_33 : f32 to vector<1x16x128xf32>
    %77 = arith.mulf %76, %75 : vector<1x16x128xf32>
    %78 = arith.maximumf %75, %77 : vector<1x16x128xf32>
    %cst_34 = arith.constant dense<0.000000e+00> : vector<1x128xf32>
    %79 = vector.multi_reduction <add>, %78, %cst_34 [1] : vector<1x16x128xf32> to vector<1x128xf32>
    %80 = vector.shape_cast %79 : vector<1x128xf32> to vector<1x1x128xf32>
    %cst_35 = arith.constant 1.600000e+01 : f32
    %81 = vector.broadcast %cst_35 : f32 to vector<1x1x128xf32>
    %82 = arith.divf %80, %81 : vector<1x1x128xf32>
    %83 = arith.mulf %78, %78 : vector<1x16x128xf32>
    %cst_36 = arith.constant dense<0.000000e+00> : vector<1x128xf32>
    %84 = vector.multi_reduction <add>, %83, %cst_36 [1] : vector<1x16x128xf32> to vector<1x128xf32>
    %85 = vector.shape_cast %84 : vector<1x128xf32> to vector<1x1x128xf32>
    %cst_37 = arith.constant 1.600000e+01 : f32
    %86 = vector.broadcast %cst_37 : f32 to vector<1x1x128xf32>
    %87 = arith.divf %85, %86 : vector<1x1x128xf32>
    %88 = arith.mulf %82, %82 : vector<1x1x128xf32>
    %89 = arith.subf %87, %88 : vector<1x1x128xf32>
    %90 = vector.broadcast %82 : vector<1x1x128xf32> to vector<1x16x128xf32>
    %91 = arith.subf %78, %90 : vector<1x16x128xf32>
    %cst_38 = arith.constant 9.99999974E-6 : f32
    %92 = vector.broadcast %cst_38 : f32 to vector<1x1x128xf32>
    %93 = arith.addf %89, %92 : vector<1x1x128xf32>
    %94 = math.rsqrt %93 : vector<1x1x128xf32>
    %95 = vector.broadcast %94 : vector<1x1x128xf32> to vector<1x16x128xf32>
    %96 = arith.mulf %91, %95 : vector<1x16x128xf32>
    %c0_39 = arith.constant 0 : index
    %c0_40 = arith.constant 0 : index
    %c0_41 = arith.constant 0 : index
    %97 = vector.load %arg7[%c0_39, %c0_40, %c0_41] : memref<1x1x64xf32, #tpu.memory_space<vmem>>, vector<1x1x64xf32>
    %98 = vector.shape_cast %97 : vector<1x1x64xf32> to vector<1x64xf32>
    %c0_42 = arith.constant 0 : index
    %c0_43 = arith.constant 0 : index
    %99 = vector.load %arg10[%c0_42, %c0_43] : memref<64x256xf32, #tpu.memory_space<vmem>>, vector<64x256xf32>
    %cst_44 = arith.constant dense<0.000000e+00> : vector<1x256xf32>
    %100 = tpu.matmul %98, %99, %cst_44 {dimension_numbers = #tpu.dot_dimension_numbers<[1], [0], [0], [1], [0, 0, 1, 1], [], []>} : vector<1x64xf32>, vector<64x256xf32>, vector<1x256xf32> -> vector<1x256xf32>
    %c0_45 = arith.constant 0 : index
    %c0_46 = arith.constant 0 : index
    %101 = vector.load %arg11[%c0_45, %c0_46] : memref<1x256xf32, #tpu.memory_space<vmem>>, vector<1x256xf32>
    %102 = arith.addf %100, %101 : vector<1x256xf32>
    %103 = vector.extract_strided_slice %102 {offsets = [0, 0], sizes = [1, 128], strides = [1, 1]} : vector<1x256xf32> to vector<1x128xf32>
    %104 = vector.shape_cast %103 : vector<1x128xf32> to vector<1x1x128xf32>
    %105 = vector.extract_strided_slice %102 {offsets = [0, 128], sizes = [1, 128], strides = [1, 1]} : vector<1x256xf32> to vector<1x128xf32>
    %106 = vector.shape_cast %105 : vector<1x128xf32> to vector<1x1x128xf32>
    %cst_47 = arith.constant 1.000000e+00 : f32
    %107 = vector.broadcast %cst_47 : f32 to vector<1x1x128xf32>
    %108 = arith.addf %104, %107 : vector<1x1x128xf32>
    %109 = vector.broadcast %108 : vector<1x1x128xf32> to vector<1x16x128xf32>
    %110 = arith.mulf %96, %109 : vector<1x16x128xf32>
    %111 = vector.broadcast %106 : vector<1x1x128xf32> to vector<1x16x128xf32>
    %112 = arith.addf %110, %111 : vector<1x16x128xf32>
    %c0_48 = arith.constant 0 : index
    %c0_49 = arith.constant 0 : index
    %c0_50 = arith.constant 0 : index
    %113 = vector.load %arg14[%c0_48, %c0_49, %c0_50] : memref<1x16x128xf32, #tpu.memory_space<vmem>>, vector<1x16x128xf32>
    tpu.vector_store %arg14[%c0_48, %c0_49, %c0_50], %112 {strides = array<i32>} : memref<1x16x128xf32, #tpu.memory_space<vmem>>, vector<1x16x128xf32>,
    return
  }
  func.func @transform_0(%arg0: i32) -> (i32, i32, i32) {
    %c0_i32 = arith.constant 0 : i32
    %c0_i32_0 = arith.constant 0 : i32
    %c0_i32_1 = arith.constant 0 : i32
    %c0_i32_2 = arith.constant 0 : i32
    return %c0_i32, %c0_i32_0, %c0_i32_1 : i32, i32, i32
  }
  func.func @transform_1(%arg0: i32) -> (i32, i32, i32) {
    %c0_i32 = arith.constant 0 : i32
    %c0_i32_0 = arith.constant 0 : i32
    %c0_i32_1 = arith.constant 0 : i32
    return %arg0, %c0_i32, %c0_i32_0 : i32, i32, i32
  }
  func.func @transform_2(%arg0: i32) -> (i32, i32, i32) {
    %c0_i32 = arith.constant 0 : i32
    %c0_i32_0 = arith.constant 0 : i32
    %c0_i32_1 = arith.constant 0 : i32
    return %arg0, %c0_i32, %c0_i32_0 : i32, i32, i32
  }
  func.func @transform_3(%arg0: i32) -> (i32, i32) {
    %c0_i32 = arith.constant 0 : i32
    %c0_i32_0 = arith.constant 0 : i32
    %c0_i32_1 = arith.constant 0 : i32
    return %c0_i32, %c0_i32_0 : i32, i32
  }
  func.func @transform_4(%arg0: i32) -> (i32, i32) {
    %c0_i32 = arith.constant 0 : i32
    %c0_i32_0 = arith.constant 0 : i32
    %c0_i32_1 = arith.constant 0 : i32
    return %c0_i32, %c0_i32_0 : i32, i32
  }
  func.func @transform_5(%arg0: i32) -> (i32, i32, i32) {
    %c0_i32 = arith.constant 0 : i32
    %c0_i32_0 = arith.constant 0 : i32
    %c0_i32_1 = arith.constant 0 : i32
    return %arg0, %c0_i32, %c0_i32_0 : i32, i32, i32
  }
  func.func @transform_6(%arg0: i32) -> (i32, i32, i32) {
    %c0_i32 = arith.constant 0 : i32
    %c0_i32_0 = arith.constant 0 : i32
    %c0_i32_1 = arith.constant 0 : i32
    return %arg0, %c0_i32, %c0_i32_0 : i32, i32, i32
  }
  func.func @transform_7(%arg0: i32) -> (i32, i32) {
    %c0_i32 = arith.constant 0 : i32
    %c0_i32_0 = arith.constant 0 : i32
    %c0_i32_1 = arith.constant 0 : i32
    return %c0_i32, %c0_i32_0 : i32, i32
  }
  func.func @transform_8(%arg0: i32) -> (i32, i32) {
    %c0_i32 = arith.constant 0 : i32
    %c0_i32_0 = arith.constant 0 : i32
    %c0_i32_1 = arith.constant 0 : i32
    return %c0_i32, %c0_i32_0 : i32, i32
  }
  func.func @transform_9(%arg0: i32) -> (i32, i32) {
    %c0_i32 = arith.constant 0 : i32
    %c0_i32_0 = arith.constant 0 : i32
    %c0_i32_1 = arith.constant 0 : i32
    return %c0_i32, %c0_i32_0 : i32, i32
  }
  func.func @transform_10(%arg0: i32) -> (i32, i32) {
    %c0_i32 = arith.constant 0 : i32
    %c0_i32_0 = arith.constant 0 : i32
    %c0_i32_1 = arith.constant 0 : i32
    return %c0_i32, %c0_i32_0 : i32, i32
  }
  func.func @transform_11(%arg0: i32) -> (i32, i32) {
    %c0_i32 = arith.constant 0 : i32
    %c0_i32_0 = arith.constant 0 : i32
    %c0_i32_1 = arith.constant 0 : i32
    return %c0_i32, %c0_i32_0 : i32, i32
  }
  func.func @transform_12(%arg0: i32) -> (i32, i32) {
    %c0_i32 = arith.constant 0 : i32
    %c0_i32_0 = arith.constant 0 : i32
    %c0_i32_1 = arith.constant 0 : i32
    return %c0_i32, %c0_i32_0 : i32, i32
  }
  func.func @transform_13(%arg0: i32) -> (i32, i32, i32) {
    %c0_i32 = arith.constant 0 : i32
    %c0_i32_0 = arith.constant 0 : i32
    %c0_i32_1 = arith.constant 0 : i32
    return %arg0, %c0_i32, %c0_i32_0 : i32, i32, i32
  }
}

</mosaic_0001>

<llo_original>
// kernel: tpu_custom_call.1
$region0: #{tpu_custom_call.1}
  #allocation0 [shape = 'u32[]', space=smem, size = 0x4, offset = 0x4, fixed_abs, tag = 'smem constant byte address 0x4 - core index']
  #allocation1 [shape = 'u32[144,128]{1,0:T(1,128)}', space=vmem, size = 0x12000, scoped, tag = 'internal scratch']
  %s0 = inlined_call_operand.vmem [shape: f32[1,16,128], index: 0, kind: input, shape index: {}]
  %s1 = inlined_call_operand.vmem [shape: f32[2,16,1], index: 1, kind: input, shape index: {}]
  %s2 = inlined_call_operand.vmem [shape: f32[2,16,1], index: 2, kind: input, shape index: {}]
  %s3 = inlined_call_operand.vmem [shape: f32[1,128], index: 3, kind: input, shape index: {}]
  %s4 = inlined_call_operand.vmem [shape: f32[1,128], index: 4, kind: input, shape index: {}]
  %s5 = inlined_call_operand.vmem [shape: f32[2,1,64], index: 5, kind: input, shape index: {}]
  %s6 = inlined_call_operand.vmem [shape: f32[2,1,64], index: 6, kind: input, shape index: {}]
  %s7 = inlined_call_operand.hbm [shape: f32[64,256], index: 7, kind: input, shape index: {}]
  %s8 = inlined_call_operand.vmem [shape: f32[1,256], index: 8, kind: input, shape index: {}]
  %s9 = inlined_call_operand.hbm [shape: f32[64,256], index: 9, kind: input, shape index: {}]
  %s10 = inlined_call_operand.vmem [shape: f32[1,256], index: 10, kind: input, shape index: {}]
  %s11 = inlined_call_operand.hbm [shape: bf16[1152,128], index: 11, kind: input, shape index: {}]
  %s12 = inlined_call_operand.vmem [shape: f32[1,128], index: 12, kind: input, shape index: {}]
  %s13 = inlined_call_operand.hbm [shape: f32[2,16,128], index: 13, kind: output, shape index: {}]
  %s14 = sld [smem:[#allocation0]]
  $region97: #{tpu_custom_call.1} parent=0
    _
  %s16 = ssub.s32 1, %s14
  %s17 = scalar_select 0, %s16, %s14
  $region1: #{tpu_custom_call.1} parent=0
    #allocation2 [shape = 'u8[65536]{0}', space=vmem, size = 0x10000, scoped, tag = 'input window, operand 7, single buffered']
    #allocation3 [shape = 's32[2]{0}', space=sflag, size = 0x8, scoped, tag = 'scoped memory for tpu_custom_call.1']
    #allocation4 [shape = 's32[2]{0}', space=sflag, size = 0x8, scoped, tag = 'scoped memory for tpu_custom_call.1']
    #allocation5 [shape = 'u8[65536]{0}', space=vmem, size = 0x10000, scoped, tag = 'input window, operand 9, single buffered']
    #allocation6 [shape = 's32[1]{0}', space=sflag, size = 0x4, scoped, tag = 'scoped memory for tpu_custom_call.1']
    #allocation7 [shape = 'u8[294912]{0}', space=vmem, size = 0x48000, scoped, tag = 'input window, operand 11, single buffered']
    #allocation8 [shape = 'u8[16384]{0}', space=vmem, size = 0x4000, scoped, tag = 'output window, operand 0']
    %18 = vsyncpa [#allocation3], 0
    %19 = vsyncpa [#allocation6], 0
    %20 = vsyncpa [#allocation4], 0
    %s21 = scalar_lea.sflag [#allocation4], 1
    %22 = vsyncpa %s21, 0
    loop: start=0, step=1, limit=4
    $region2: #{tpu_custom_call.1} parent=1 // loop_pre_header
      _
    $region3: #{tpu_custom_call.1} parent=1 // loop_header
      %s24 = sphi 0, %s28
      %p25 = scmp.ge.s32.totalorder %s24, 4
      %s32 = sphi 0, %s32
      %s34 = sphi 0, %s32
      %s35 = sphi 0, %s34
      %s49 = sphi 0, %s35
      %s55 = sphi 0, %s57
      %s58 = sphi 0, %s55
      %s59 = sphi 0, %s58
      %s75 = sphi 0, %s59
      %s81 = sphi 0, %s83
      %s84 = sphi 0, %s81
      %s85 = sphi 0, %s84
      %s101 = sphi 0, %s85
      %s105 = sphi 0, %s105
      %s107 = sphi 0, %s105
      %s108 = sphi 0, %s107
      %s122 = sphi 0, %s108
      %s126 = sphi 0, %s126
      %s128 = sphi 0, %s126
      %s129 = sphi 0, %s128
      %s143 = sphi 0, %s129
      %s149 = sphi 0, %s151
      %s152 = sphi 0, %s149
      %s153 = sphi 0, %s152
      %s169 = sphi 0, %s153
      %s175 = sphi 0, %s177
      %s178 = sphi 0, %s175
      %s179 = sphi 0, %s178
      %s195 = sphi 0, %s179
      %s199 = sphi 0, %s199
      %s201 = sphi 0, %s199
      %s202 = sphi 0, %s201
      %s216 = sphi 0, %s202
      %s220 = sphi 0, %s220
      %s222 = sphi 0, %s220
      %s223 = sphi 0, %s222
      %s237 = sphi 0, %s223
      %s241 = sphi 0, %s241
      %s243 = sphi 0, %s241
      %s244 = sphi 0, %s243
      %s258 = sphi 0, %s244
      %s262 = sphi 0, %s262
      %s264 = sphi 0, %s262
      %s265 = sphi 0, %s264
      %s279 = sphi 0, %s265
      %s283 = sphi 0, %s283
      %s285 = sphi 0, %s283
      %s286 = sphi 0, %s285
      %s300 = sphi 0, %s286
      %s304 = sphi 0, %s304
      %s306 = sphi 0, %s304
      %s307 = sphi 0, %s306
      %s321 = sphi 0, %s307
      %s327 = sphi 0, %s329
      %s330 = sphi 0, %s327
      %s331 = sphi 0, %s330
      %s347 = sphi 0, %s331
    $region4: #{tpu_custom_call.1} parent=1 // loop_header_branch
      %27 = sbr.rel (%p25) target = $region8
    $region5: #{tpu_custom_call.1} parent=1 // loop_body
      %s29 = ssub.s32 %s24, 1
      %s30 = ssub.s32 %s24, 2
      %s31 = sadd.s32 %s24, 1
      %s33 = sadd.s32 %s32, 1
      %p36 = scmp.eq.s32.totalorder %s24, 1
      %p37 = scmp.ne.s32.totalorder %s32, %s34
      %p38 = scmp.eq.s32.totalorder %s24, 0
      %p39 = por %p37, %p38
      %p40 = scmp.ne.s32.totalorder %s32, %s34
      %p41 = scmp.eq.s32.totalorder %s29, 1
      %p42 = por %p40, %p41
      %p43 = scmp.ne.s32.totalorder %s34, %s35
      %p44 = scmp.eq.s32.totalorder %s29, 0
      %p45 = por %p43, %p44
      %p46 = scmp.ne.s32.totalorder %s34, %s35
      %p47 = scmp.eq.s32.totalorder %s30, 1
      %p48 = por %p46, %p47
      %p50 = scmp.ne.s32.totalorder %s35, %s49
      %p51 = scmp.eq.s32.totalorder %s30, 0
      %p52 = por %p50, %p51
      %s53 = ssub.s32 %s24, %s31
      %p54 = scmp.eq.s32.totalorder %s53, 0
      %s56 = sadd.s32 %s55, 1
      %s57 = scalar_select %p54, %s55, %s56
      %p60 = pneg %p54
      %p61 = scmp.eq.s32.totalorder %s24, 1
      %p62 = por %p60, %p61
      %p63 = scmp.ne.s32.totalorder %s55, %s58
      %p64 = scmp.eq.s32.totalorder %s24, 0
      %p65 = por %p63, %p64
      %p66 = scmp.ne.s32.totalorder %s55, %s58
      %p67 = scmp.eq.s32.totalorder %s29, 1
      %p68 = por %p66, %p67
      %p69 = scmp.ne.s32.totalorder %s58, %s59
      %p70 = scmp.eq.s32.totalorder %s29, 0
      %p71 = por %p69, %p70
      %p72 = scmp.ne.s32.totalorder %s58, %s59
      %p73 = scmp.eq.s32.totalorder %s30, 1
      %p74 = por %p72, %p73
      %p76 = scmp.ne.s32.totalorder %s59, %s75
      %p77 = scmp.eq.s32.totalorder %s30, 0
      %p78 = por %p76, %p77
      %s79 = ssub.s32 %s24, %s31
      %p80 = scmp.eq.s32.totalorder %s79, 0
      %s82 = sadd.s32 %s81, 1
      %s83 = scalar_select %p80, %s81, %s82
      %p86 = pneg %p80
      %p87 = scmp.eq.s32.totalorder %s24, 1
      %p88 = por %p86, %p87
      %p89 = scmp.ne.s32.totalorder %s81, %s84
      %p90 = scmp.eq.s32.totalorder %s24, 0
      %p91 = por %p89, %p90
      %p92 = scmp.ne.s32.totalorder %s81, %s84
      %p93 = scmp.eq.s32.totalorder %s29, 1
      %p94 = por %p92, %p93
      %p95 = scmp.ne.s32.totalorder %s84, %s85
      %p96 = scmp.eq.s32.totalorder %s29, 0
      %p97 = por %p95, %p96
      %p98 = scmp.ne.s32.totalorder %s84, %s85
      %p99 = scmp.eq.s32.totalorder %s30, 1
      %p100 = por %p98, %p99
      %p102 = scmp.ne.s32.totalorder %s85, %s101
      %p103 = scmp.eq.s32.totalorder %s30, 0
      %p104 = por %p102, %p103
      %s106 = sadd.s32 %s105, 1
      %p109 = scmp.eq.s32.totalorder %s24, 1
      %p110 = scmp.ne.s32.totalorder %s105, %s107
      %p111 = scmp.eq.s32.totalorder %s24, 0
      %p112 = por %p110, %p111
      %p113 = scmp.ne.s32.totalorder %s105, %s107
      %p114 = scmp.eq.s32.totalorder %s29, 1
      %p115 = por %p113, %p114
      %p116 = scmp.ne.s32.totalorder %s107, %s108
      %p117 = scmp.eq.s32.totalorder %s29, 0
      %p118 = por %p116, %p117
      %p119 = scmp.ne.s32.totalorder %s107, %s108
      %p120 = scmp.eq.s32.totalorder %s30, 1
      %p121 = por %p119, %p120
      %p123 = scmp.ne.s32.totalorder %s108, %s122
      %p124 = scmp.eq.s32.totalorder %s30, 0
      %p125 = por %p123, %p124
      %s127 = sadd.s32 %s126, 1
      %p130 = scmp.eq.s32.totalorder %s24, 1
      %p131 = scmp.ne.s32.totalorder %s126, %s128
      %p132 = scmp.eq.s32.totalorder %s24, 0
      %p133 = por %p131, %p132
      %p134 = scmp.ne.s32.totalorder %s126, %s128
      %p135 = scmp.eq.s32.totalorder %s29, 1
      %p136 = por %p134, %p135
      %p137 = scmp.ne.s32.totalorder %s128, %s129
      %p138 = scmp.eq.s32.totalorder %s29, 0
      %p139 = por %p137, %p138
      %p140 = scmp.ne.s32.totalorder %s128, %s129
      %p141 = scmp.eq.s32.totalorder %s30, 1
      %p142 = por %p140, %p141
      %p144 = scmp.ne.s32.totalorder %s129, %s143
      %p145 = scmp.eq.s32.totalorder %s30, 0
      %p146 = por %p144, %p145
      %s147 = ssub.s32 %s24, %s31
      %p148 = scmp.eq.s32.totalorder %s147, 0
      %s150 = sadd.s32 %s149, 1
      %s151 = scalar_select %p148, %s149, %s150
      %p154 = pneg %p148
      %p155 = scmp.eq.s32.totalorder %s24, 1
      %p156 = por %p154, %p155
      %p157 = scmp.ne.s32.totalorder %s149, %s152
      %p158 = scmp.eq.s32.totalorder %s24, 0
      %p159 = por %p157, %p158
      %p160 = scmp.ne.s32.totalorder %s149, %s152
      %p161 = scmp.eq.s32.totalorder %s29, 1
      %p162 = por %p160, %p161
      %p163 = scmp.ne.s32.totalorder %s152, %s153
      %p164 = scmp.eq.s32.totalorder %s29, 0
      %p165 = por %p163, %p164
      %p166 = scmp.ne.s32.totalorder %s152, %s153
      %p167 = scmp.eq.s32.totalorder %s30, 1
      %p168 = por %p166, %p167
      %p170 = scmp.ne.s32.totalorder %s153, %s169
      %p171 = scmp.eq.s32.totalorder %s30, 0
      %p172 = por %p170, %p171
      %s173 = ssub.s32 %s24, %s31
      %p174 = scmp.eq.s32.totalorder %s173, 0
      %s176 = sadd.s32 %s175, 1
      %s177 = scalar_select %p174, %s175, %s176
      %p180 = pneg %p174
      %p181 = scmp.eq.s32.totalorder %s24, 1
      %p182 = por %p180, %p181
      %p183 = scmp.ne.s32.totalorder %s175, %s178
      %p184 = scmp.eq.s32.totalorder %s24, 0
      %p185 = por %p183, %p184
      %p186 = scmp.ne.s32.totalorder %s175, %s178
      %p187 = scmp.eq.s32.totalorder %s29, 1
      %p188 = por %p186, %p187
      %p189 = scmp.ne.s32.totalorder %s178, %s179
      %p190 = scmp.eq.s32.totalorder %s29, 0
      %p191 = por %p189, %p190
      %p192 = scmp.ne.s32.totalorder %s178, %s179
      %p193 = scmp.eq.s32.totalorder %s30, 1
      %p194 = por %p192, %p193
      %p196 = scmp.ne.s32.totalorder %s179, %s195
      %p197 = scmp.eq.s32.totalorder %s30, 0
      %p198 = por %p196, %p197
      %s200 = sadd.s32 %s199, 1
      %p203 = scmp.eq.s32.totalorder %s24, 1
      %p204 = scmp.ne.s32.totalorder %s199, %s201
      %p205 = scmp.eq.s32.totalorder %s24, 0
      %p206 = por %p204, %p205
      %p207 = scmp.ne.s32.totalorder %s199, %s201
      %p208 = scmp.eq.s32.totalorder %s29, 1
      %p209 = por %p207, %p208
      %p210 = scmp.ne.s32.totalorder %s201, %s202
      %p211 = scmp.eq.s32.totalorder %s29, 0
      %p212 = por %p210, %p211
      %p213 = scmp.ne.s32.totalorder %s201, %s202
      %p214 = scmp.eq.s32.totalorder %s30, 1
      %p215 = por %p213, %p214
      %p217 = scmp.ne.s32.totalorder %s202, %s216
      %p218 = scmp.eq.s32.totalorder %s30, 0
      %p219 = por %p217, %p218
      %s221 = sadd.s32 %s220, 1
      %p224 = scmp.eq.s32.totalorder %s24, 1
      %p225 = scmp.ne.s32.totalorder %s220, %s222
      %p226 = scmp.eq.s32.totalorder %s24, 0
      %p227 = por %p225, %p226
      %p228 = scmp.ne.s32.totalorder %s220, %s222
      %p229 = scmp.eq.s32.totalorder %s29, 1
      %p230 = por %p228, %p229
      %p231 = scmp.ne.s32.totalorder %s222, %s223
      %p232 = scmp.eq.s32.totalorder %s29, 0
      %p233 = por %p231, %p232
      %p234 = scmp.ne.s32.totalorder %s222, %s223
      %p235 = scmp.eq.s32.totalorder %s30, 1
      %p236 = por %p234, %p235
      %p238 = scmp.ne.s32.totalorder %s223, %s237
      %p239 = scmp.eq.s32.totalorder %s30, 0
      %p240 = por %p238, %p239
      %s242 = sadd.s32 %s241, 1
      %p245 = scmp.eq.s32.totalorder %s24, 1
      %p246 = scmp.ne.s32.totalorder %s241, %s243
      %p247 = scmp.eq.s32.totalorder %s24, 0
      %p248 = por %p246, %p247
      %p249 = scmp.ne.s32.totalorder %s241, %s243
      %p250 = scmp.eq.s32.totalorder %s29, 1
      %p251 = por %p249, %p250
      %p252 = scmp.ne.s32.totalorder %s243, %s244
      %p253 = scmp.eq.s32.totalorder %s29, 0
      %p254 = por %p252, %p253
      %p255 = scmp.ne.s32.totalorder %s243, %s244
      %p256 = scmp.eq.s32.totalorder %s30, 1
      %p257 = por %p255, %p256
      %p259 = scmp.ne.s32.totalorder %s244, %s258
      %p260 = scmp.eq.s32.totalorder %s30, 0
      %p261 = por %p259, %p260
      %s263 = sadd.s32 %s262, 1
      %p266 = scmp.eq.s32.totalorder %s24, 1
      %p267 = scmp.ne.s32.totalorder %s262, %s264
      %p268 = scmp.eq.s32.totalorder %s24, 0
      %p269 = por %p267, %p268
      %p270 = scmp.ne.s32.totalorder %s262, %s264
      %p271 = scmp.eq.s32.totalorder %s29, 1
      %p272 = por %p270, %p271
      %p273 = scmp.ne.s32.totalorder %s264, %s265
      %p274 = scmp.eq.s32.totalorder %s29, 0
      %p275 = por %p273, %p274
      %p276 = scmp.ne.s32.totalorder %s264, %s265
      %p277 = scmp.eq.s32.totalorder %s30, 1
      %p278 = por %p276, %p277
      %p280 = scmp.ne.s32.totalorder %s265, %s279
      %p281 = scmp.eq.s32.totalorder %s30, 0
      %p282 = por %p280, %p281
      %s284 = sadd.s32 %s283, 1
      %p287 = scmp.eq.s32.totalorder %s24, 1
      %p288 = scmp.ne.s32.totalorder %s283, %s285
      %p289 = scmp.eq.s32.totalorder %s24, 0
      %p290 = por %p288, %p289
      %p291 = scmp.ne.s32.totalorder %s283, %s285
      %p292 = scmp.eq.s32.totalorder %s29, 1
      %p293 = por %p291, %p292
      %p294 = scmp.ne.s32.totalorder %s285, %s286
      %p295 = scmp.eq.s32.totalorder %s29, 0
      %p296 = por %p294, %p295
      %p297 = scmp.ne.s32.totalorder %s285, %s286
      %p298 = scmp.eq.s32.totalorder %s30, 1
      %p299 = por %p297, %p298
      %p301 = scmp.ne.s32.totalorder %s286, %s300
      %p302 = scmp.eq.s32.totalorder %s30, 0
      %p303 = por %p301, %p302
      %s305 = sadd.s32 %s304, 1
      %p308 = scmp.eq.s32.totalorder %s24, 1
      %p309 = scmp.ne.s32.totalorder %s304, %s306
      %p310 = scmp.eq.s32.totalorder %s24, 0
      %p311 = por %p309, %p310
      %p312 = scmp.ne.s32.totalorder %s304, %s306
      %p313 = scmp.eq.s32.totalorder %s29, 1
      %p314 = por %p312, %p313
      %p315 = scmp.ne.s32.totalorder %s306, %s307
      %p316 = scmp.eq.s32.totalorder %s29, 0
      %p317 = por %p315, %p316
      %p318 = scmp.ne.s32.totalorder %s306, %s307
      %p319 = scmp.eq.s32.totalorder %s30, 1
      %p320 = por %p318, %p319
      %p322 = scmp.ne.s32.totalorder %s307, %s321
      %p323 = scmp.eq.s32.totalorder %s30, 0
      %p324 = por %p322, %p323
      %s325 = ssub.s32 %s24, %s31
      %p326 = scmp.eq.s32.totalorder %s325, 0
      %s328 = sadd.s32 %s327, 1
      %s329 = scalar_select %p326, %s327, %s328
      %p332 = pneg %p326
      %p333 = scmp.eq.s32.totalorder %s24, 1
      %p334 = por %p332, %p333
      %p335 = scmp.ne.s32.totalorder %s327, %s330
      %p336 = scmp.eq.s32.totalorder %s24, 0
      %p337 = por %p335, %p336
      %p338 = scmp.ne.s32.totalorder %s327, %s330
      %p339 = scmp.eq.s32.totalorder %s29, 1
      %p340 = por %p338, %p339
      %p341 = scmp.ne.s32.totalorder %s330, %s331
      %p342 = scmp.eq.s32.totalorder %s29, 0
      %p343 = por %p341, %p342
      %p344 = scmp.ne.s32.totalorder %s330, %s331
      %p345 = scmp.eq.s32.totalorder %s30, 1
      %p346 = por %p344, %p345
      %p348 = scmp.ne.s32.totalorder %s331, %s347
      %p349 = scmp.eq.s32.totalorder %s30, 0
      %p350 = por %p348, %p349
      %p351 = scmp.le.s32.totalorder 1, %s24
      %p352 = scmp.lt.s32.totalorder %s24, 3
      %p353 = pnand %p351, %p352
      %p354 = pneg %p353
      // Predicated region
      $region9: #{tpu_custom_call.1} parent=5 // pred_check
        _
      $region10: #{tpu_custom_call.1} parent=5 // pred_check_branch
        %356 = sbr.rel (%p353) target = $region12
      $region11: #{tpu_custom_call.1} parent=5 // pred_region
        %s357 = ssub.s32 %s24, 1
        // Predicated region
        $region13: #{tpu_custom_call.1} parent=11 // pred_check
          %p358 = pneg %p45
        $region14: #{tpu_custom_call.1} parent=11 // pred_check_branch
          %360 = sbr.rel (%p358) target = $region16
        $region15: #{tpu_custom_call.1} parent=11 // pred_region
          _
        $region16: #{tpu_custom_call.1} parent=11 // pred_fallthru
          _
        // Predicated region
        $region17: #{tpu_custom_call.1} parent=11 // pred_check
          %p361 = pneg %p118
        $region18: #{tpu_custom_call.1} parent=11 // pred_check_branch
          %363 = sbr.rel (%p361) target = $region20
        $region19: #{tpu_custom_call.1} parent=11 // pred_region
          _
        $region20: #{tpu_custom_call.1} parent=11 // pred_fallthru
          _
        // Predicated region
        $region21: #{tpu_custom_call.1} parent=11 // pred_check
          %p364 = pneg %p139
        $region22: #{tpu_custom_call.1} parent=11 // pred_check_branch
          %366 = sbr.rel (%p364) target = $region24
        $region23: #{tpu_custom_call.1} parent=11 // pred_region
          _
        $region24: #{tpu_custom_call.1} parent=11 // pred_fallthru
          _
        // Predicated region
        $region25: #{tpu_custom_call.1} parent=11 // pred_check
          %p367 = pneg %p212
        $region26: #{tpu_custom_call.1} parent=11 // pred_check_branch
          %369 = sbr.rel (%p367) target = $region28
        $region27: #{tpu_custom_call.1} parent=11 // pred_region
          %s371 = ssub.s32 2048, 2048
          %372 = vsyncadd [#allocation3], %s371
          %s373 = sshll.u32 [#allocation2], 4
          %s374 = int_to_ptr.vmem [resolvable:$true] %s373
          %379 = dma.hbm_to_vmem [thread:$0]  %s7, 2048, %s374, [#allocation3], 256, 256, 16
        $region28: #{tpu_custom_call.1} parent=11 // pred_fallthru
          _
        // Predicated region
        $region29: #{tpu_custom_call.1} parent=11 // pred_check
          %p380 = pneg %p233
        $region30: #{tpu_custom_call.1} parent=11 // pred_check_branch
          %382 = sbr.rel (%p380) target = $region32
        $region31: #{tpu_custom_call.1} parent=11 // pred_region
          _
        $region32: #{tpu_custom_call.1} parent=11 // pred_fallthru
          _
        // Predicated region
        $region33: #{tpu_custom_call.1} parent=11 // pred_check
          %p383 = pneg %p254
        $region34: #{tpu_custom_call.1} parent=11 // pred_check_branch
          %385 = sbr.rel (%p383) target = $region36
        $region35: #{tpu_custom_call.1} parent=11 // pred_region
          %s387 = ssub.s32 2048, 2048
          %388 = vsyncadd [#allocation6], %s387
          %s389 = sshll.u32 [#allocation5], 4
          %s390 = int_to_ptr.vmem [resolvable:$true] %s389
          %395 = dma.hbm_to_vmem [thread:$0]  %s9, 2048, %s390, [#allocation6], 256, 256, 16
        $region36: #{tpu_custom_call.1} parent=11 // pred_fallthru
          _
        // Predicated region
        $region37: #{tpu_custom_call.1} parent=11 // pred_check
          %p396 = pneg %p275
        $region38: #{tpu_custom_call.1} parent=11 // pred_check_branch
          %398 = sbr.rel (%p396) target = $region40
        $region39: #{tpu_custom_call.1} parent=11 // pred_region
          _
        $region40: #{tpu_custom_call.1} parent=11 // pred_fallthru
          _
        // Predicated region
        $region41: #{tpu_custom_call.1} parent=11 // pred_check
          %p399 = pneg %p296
        $region42: #{tpu_custom_call.1} parent=11 // pred_check_branch
          %401 = sbr.rel (%p399) target = $region44
        $region43: #{tpu_custom_call.1} parent=11 // pred_region
          %s403 = ssub.s32 9216, 9216
          %404 = vsyncadd [#allocation6], %s403
          %s405 = sshll.u32 [#allocation7], 4
          %s406 = int_to_ptr.vmem [resolvable:$true] %s405
          %411 = dma.hbm_to_vmem [thread:$0]  %s11, 9216, %s406, [#allocation6], 64, 64, 4
        $region44: #{tpu_custom_call.1} parent=11 // pred_fallthru
          _
        // Predicated region
        $region45: #{tpu_custom_call.1} parent=11 // pred_check
          %p412 = pneg %p317
        $region46: #{tpu_custom_call.1} parent=11 // pred_check_branch
          %414 = sbr.rel (%p412) target = $region48
        $region47: #{tpu_custom_call.1} parent=11 // pred_region
          _
        $region48: #{tpu_custom_call.1} parent=11 // pred_fallthru
          _
      $region12: #{tpu_custom_call.1} parent=5 // pred_fallthru
        _
      %p415 = scmp.lt.s32.totalorder %s24, 2
      // Predicated region
      $region49: #{tpu_custom_call.1} parent=5 // pred_check
        %p416 = pneg %p415
      $region50: #{tpu_custom_call.1} parent=5 // pred_check_branch
        %418 = sbr.rel (%p416) target = $region52
      $region51: #{tpu_custom_call.1} parent=5 // pred_region
        // Predicated region
        $region53: #{tpu_custom_call.1} parent=51 // pred_check
          %p419 = pneg %p65
        $region54: #{tpu_custom_call.1} parent=51 // pred_check_branch
          %421 = sbr.rel (%p419) target = $region56
        $region55: #{tpu_custom_call.1} parent=51 // pred_region
          %p422 = scmp.lt.s32.totalorder %s24, 1
          %s423 = scalar_select %p422, %s24, 1
          %s424 = smul.addr %s423, 2
          %s425 = smul.addr %s424, 8
          %s426 = scalar_lea.vmem %s1, %s425
        $region56: #{tpu_custom_call.1} parent=51 // pred_fallthru
          _
        // Predicated region
        $region57: #{tpu_custom_call.1} parent=51 // pred_check
          %p427 = pneg %p91
        $region58: #{tpu_custom_call.1} parent=51 // pred_check_branch
          %429 = sbr.rel (%p427) target = $region60
        $region59: #{tpu_custom_call.1} parent=51 // pred_region
          %p430 = scmp.lt.s32.totalorder %s24, 1
          %s431 = scalar_select %p430, %s24, 1
          %s432 = smul.addr %s431, 2
          %s433 = smul.addr %s432, 8
          %s434 = scalar_lea.vmem %s2, %s433
        $region60: #{tpu_custom_call.1} parent=51 // pred_fallthru
          _
        // Predicated region
        $region61: #{tpu_custom_call.1} parent=51 // pred_check
          %p435 = pneg %p159
        $region62: #{tpu_custom_call.1} parent=51 // pred_check_branch
          %437 = sbr.rel (%p435) target = $region64
        $region63: #{tpu_custom_call.1} parent=51 // pred_region
          %p438 = scmp.lt.s32.totalorder %s24, 1
          %s439 = scalar_select %p438, %s24, 1
          %s440 = scalar_lea.vmem %s5, %s439
        $region64: #{tpu_custom_call.1} parent=51 // pred_fallthru
          _
        // Predicated region
        $region65: #{tpu_custom_call.1} parent=51 // pred_check
          %p441 = pneg %p185
        $region66: #{tpu_custom_call.1} parent=51 // pred_check_branch
          %443 = sbr.rel (%p441) target = $region68
        $region67: #{tpu_custom_call.1} parent=51 // pred_region
          %p444 = scmp.lt.s32.totalorder %s24, 1
          %s445 = scalar_select %p444, %s24, 1
          %s446 = scalar_lea.vmem %s6, %s445
        $region68: #{tpu_custom_call.1} parent=51 // pred_fallthru
          _
      $region52: #{tpu_custom_call.1} parent=5 // pred_fallthru
        _
      %p447 = scmp.le.s32.totalorder 1, %s24
      %p448 = scmp.lt.s32.totalorder %s24, 3
      %p449 = pnand %p447, %p448
      %p450 = pneg %p449
      // Predicated region
      $region69: #{tpu_custom_call.1} parent=5 // pred_check
        _
      $region70: #{tpu_custom_call.1} parent=5 // pred_check_branch
        %452 = sbr.rel (%p449) target = $region72
      $region71: #{tpu_custom_call.1} parent=5 // pred_region
        %s453 = ssub.s32 %s24, 1
        // Predicated region
        $region73: #{tpu_custom_call.1} parent=71 // pred_check
          %p454 = pneg %p212
        $region74: #{tpu_custom_call.1} parent=71 // pred_check_branch
          %456 = sbr.rel (%p454) target = $region76
        $region75: #{tpu_custom_call.1} parent=71 // pred_region
          %457 = dma.done [#allocation3], 2048
        $region76: #{tpu_custom_call.1} parent=71 // pred_fallthru
          _
        // Predicated region
        $region77: #{tpu_custom_call.1} parent=71 // pred_check
          %p458 = pneg %p254
        $region78: #{tpu_custom_call.1} parent=71 // pred_check_branch
          %460 = sbr.rel (%p458) target = $region80
        $region79: #{tpu_custom_call.1} parent=71 // pred_region
          %461 = dma.done [#allocation6], 2048
        $region80: #{tpu_custom_call.1} parent=71 // pred_fallthru
          _
        // Predicated region
        $region81: #{tpu_custom_call.1} parent=71 // pred_check
          %p462 = pneg %p296
        $region82: #{tpu_custom_call.1} parent=71 // pred_check_branch
          %464 = sbr.rel (%p462) target = $region84
        $region83: #{tpu_custom_call.1} parent=71 // pred_region
          %465 = dma.done [#allocation6], 9216
        $region84: #{tpu_custom_call.1} parent=71 // pred_fallthru
          _
        %p466 = pneg %p45
        %p467 = pneg %p42
        %p468 = scmp.lt.s32.totalorder %s29, 1
        %s469 = scalar_select %p468, %s29, 1
        %s470 = smul.addr %s469, 2
        %s471 = smul.addr %s470, 8
        %s472 = scalar_lea.vmem %s1, %s471
        %p473 = pneg %p71
        %p474 = pneg %p68
        %p475 = scmp.lt.s32.totalorder %s29, 1
        %s476 = scalar_select %p475, %s29, 1
        %s477 = smul.addr %s476, 2
        %s478 = smul.addr %s477, 8
        %s479 = scalar_lea.vmem %s2, %s478
        %p480 = pneg %p97
        %p481 = pneg %p94
        %p482 = pneg %p118
        %p483 = pneg %p115
        %p484 = pneg %p139
        %p485 = pneg %p136
        %p486 = scmp.lt.s32.totalorder %s29, 1
        %s487 = scalar_select %p486, %s29, 1
        %s488 = scalar_lea.vmem %s5, %s487
        %p489 = pneg %p165
        %p490 = pneg %p162
        %p491 = scmp.lt.s32.totalorder %s29, 1
        %s492 = scalar_select %p491, %s29, 1
        %s493 = scalar_lea.vmem %s6, %s492
        %p494 = pneg %p191
        %p495 = pneg %p188
        %p496 = pneg %p212
        %p497 = pneg %p209
        %p498 = pneg %p233
        %p499 = pneg %p230
        %p500 = pneg %p254
        %p501 = pneg %p251
        %p502 = pneg %p275
        %p503 = pneg %p272
        %p504 = pneg %p296
        %p505 = pneg %p293
        %p506 = pneg %p317
        %p507 = pneg %p314
        %p508 = pneg %p343
        %p509 = pneg %p340
        %s510 = sand.u32 %s330, 1
        %s511 = scalar_lea.sflag [#allocation4], %s510
        %s512 = sand.u32 %s330, 1
        %s513 = smul.addr %s512, 16
        %s514 = scalar_lea.vmem [#allocation8], %s513
        %p515 = scmp.lt.s32.totalorder %s29, 1
        %s516 = scalar_select %p515, %s29, 1
        %s517 = smul.addr %s516, 2
        %s518 = smul.addr %s517, 8
        %s519 = scalar_lea.vmem %s1, %s518
        %p520 = scmp.lt.s32.totalorder %s29, 1
        %s521 = scalar_select %p520, %s29, 1
        %s522 = smul.addr %s521, 2
        %s523 = smul.addr %s522, 8
        %s524 = scalar_lea.vmem %s2, %s523
        %p525 = scmp.lt.s32.totalorder %s29, 1
        %s526 = scalar_select %p525, %s29, 1
        %s527 = scalar_lea.vmem %s5, %s526
        %p528 = scmp.lt.s32.totalorder %s29, 1
        %s529 = scalar_select %p528, %s29, 1
        %s530 = scalar_lea.vmem %s6, %s529
        %v532 = vld [vmem:[%s0] sm:$0xff]
        %v533 = vld [vmem:[%s0 + $0x8] sm:$0xff]
        %v534 = vld [vmem:[%s519] sm:$0xff]
        %v535 = vld [vmem:[%s519 + $0x8] sm:$0xff]
        %v536 = vld [vmem:[%s3] sm:$0x1]
        %538 = vset.pattern.permute.xlu0 0
        %539 = vperm.xlu0 %538, %v534
        %v540 = vpop.permute.xlu0 %539
        %543 = vset.pattern.permute.xlu0 0
        %544 = vperm.xlu0 %543, %v535
        %v545 = vpop.permute.xlu0 %544
        %v548 = vlaneseq
        %v549 = vshrl.u32 %v548, 7
        %v550 = vsub.s32 0, %v549
        %v551 = vrot.slane %v536, %v550
        %v553 = vmul.f32 %v540, %v551
        %v554 = vmul.f32 %v545, %v551
        %v555 = vadd.f32 %v532, %v553
        %v556 = vadd.f32 %v533, %v554
        %v557 = vmul.f32 %v555, 0.2
        %v558 = vmul.f32 %v556, 0.2
        %v559 = vmax.f32 %v555, %v557
        %v560 = vmax.f32 %v556, %v558
        %v561 = vadd.f32 %v559, %v560
        %v562 = vrot.slane %v561, 4
        %v563 = vadd.f32 %v561, %v562
        %v564 = vrot.slane %v563, 2
        %v565 = vadd.f32 %v563, %v564
        %v566 = vrot.slane %v565, 1
        %v567 = vadd.f32 %v565, %v566
        %v568 = vrcp.pop 16.0
        %v569 = vmul.f32 %v567, %v568
        %v570 = vmul.f32 %v559, %v559
        %v571 = vmul.f32 %v560, %v560
        %v572 = vadd.f32 %v570, %v571
        %v573 = vrot.slane %v572, 4
        %v574 = vadd.f32 %v572, %v573
        %v575 = vrot.slane %v574, 2
        %v576 = vadd.f32 %v574, %v575
        %v577 = vrot.slane %v576, 1
        %v578 = vadd.f32 %v576, %v577
        %v579 = vmul.f32 %v578, %v568
        %v580 = vmul.f32 %v569, %v569
        %v581 = vsub.f32 %v579, %v580
        %v582 = vsub.f32 %v559, %v569
        %v583 = vsub.f32 %v560, %v569
        %v584 = vadd.f32 %v581, 1e-05
        %v585 = vrsqrt.pop %v584
        %v586 = vmul.f32 %v582, %v585
        %v587 = vmul.f32 %v583, %v585
        %v588 = vld [vmem:[%s527] sm:$0x1]
        %v589 = vld [vmem:[#allocation2] sm:$0xff]
        %v590 = vld [vmem:[#allocation2 + $0x8] sm:$0xff]
        %v591 = vld [vmem:[#allocation2 + $0x10] sm:$0xff]
        %v592 = vld [vmem:[#allocation2 + $0x18] sm:$0xff]
        %v593 = vld [vmem:[#allocation2 + $0x20] sm:$0xff]
        %v594 = vld [vmem:[#allocation2 + $0x28] sm:$0xff]
        %v595 = vld [vmem:[#allocation2 + $0x30] sm:$0xff]
        %v596 = vld [vmem:[#allocation2 + $0x38] sm:$0xff]
        %v597 = vld [vmem:[#allocation2 + $0x40] sm:$0xff]
        %v598 = vld [vmem:[#allocation2 + $0x48] sm:$0xff]
        %v599 = vld [vmem:[#allocation2 + $0x50] sm:$0xff]
        %v600 = vld [vmem:[#allocation2 + $0x58] sm:$0xff]
        %v601 = vld [vmem:[#allocation2 + $0x60] sm:$0xff]
        %v602 = vld [vmem:[#allocation2 + $0x68] sm:$0xff]
        %v603 = vld [vmem:[#allocation2 + $0x70] sm:$0xff]
        %v604 = vld [vmem:[#allocation2 + $0x78] sm:$0xff]
        %v605 = vld [vmem:[%s8] sm:$0x3]
        %v607 = vlaneseq
        %v608 = vshrl.u32 %v607, 7
        %v609 = vsub.s32 0, %v608
        %v610 = vrot.slane %v605, %v609
        %v611 = vlaneseq
        %v612 = vshrl.u32 %v611, 7
        %v613 = vsub.s32 1, %v612
        %v614 = vrot.slane %v605, %v613
        %vm617 = vcmask 523264
        %v619 = vsel %vm617, %v588, 0
        %621 = vmatprep.subr.mxu0 %v590
        %622 = vmatpush1.msra.mxu0 %v589
        %623 = vmatprep.subr.mxu0 %v592
        %624 = vmatpush1.msra.mxu0 %v591
        %625 = vmatprep.subr.mxu0 %v594
        %626 = vmatpush1.msra.mxu0 %v593
        %627 = vmatprep.subr.mxu0 %v596
        %628 = vmatpush1.msra.mxu0 %v595
        %629 = vmatprep.subr.mxu0 %v598
        %630 = vmatpush1.msra.mxu0 %v597
        %631 = vmatprep.subr.mxu0 %v600
        %632 = vmatpush1.msra.mxu0 %v599
        %633 = vmatprep.subr.mxu0 %v602
        %634 = vmatpush1.msra.mxu0 %v601
        %635 = vmatprep.subr.mxu0 %v604
        %636 = vmatpush1.msra.mxu0 %v603
        %637 = vmatprep.subr.mxu0 0.0
        %638 = vmatpush1.msra.mxu0 0.0
        %639 = vmatprep.subr.mxu0 0.0
        %640 = vmatpush1.msra.mxu0 0.0
        %641 = vmatprep.subr.mxu0 0.0
        %642 = vmatpush1.msra.mxu0 0.0
        %643 = vmatprep.subr.mxu0 0.0
        %644 = vmatpush1.msra.mxu0 0.0
        %645 = vmatprep.subr.mxu0 0.0
        %646 = vmatpush1.msra.mxu0 0.0
        %647 = vmatprep.subr.mxu0 0.0
        %648 = vmatpush1.msra.mxu0 0.0
        %649 = vmatprep.subr.mxu0 0.0
        %650 = vmatpush1.msra.mxu0 0.0
        %651 = vmatprep.subr.mxu0 0.0
        %652 = vmatpush1.msra.mxu0 0.0
        %653 = vmatprep.subr.mxu0 0.0
        %654 = vmatpush1.msra.mxu0 0.0
        %655 = vmatprep.subr.mxu0 0.0
        %656 = vmatpush1.msra.mxu0 0.0
        %657 = vmatprep.subr.mxu0 0.0
        %658 = vmatpush1.msra.mxu0 0.0
        %659 = vmatprep.subr.mxu0 0.0
        %660 = vmatpush1.msra.mxu0 0.0
        %661 = vmatprep.subr.mxu0 0.0
        %662 = vmatpush1.msra.mxu0 0.0
        %663 = vmatprep.subr.mxu0 0.0
        %664 = vmatpush1.msra.mxu0 0.0
        %665 = vmatprep.subr.mxu0 0.0
        %666 = vmatpush1.msra.mxu0 0.0
        %667 = vmatprep.subr.mxu0 0.0
        %668 = vmatpush1.msra.mxu0 0.0
        %669 = vmatprep.subr.mxu0 0.0
        %670 = vmatpush1.msra.mxu0 0.0
        %671 = vmatprep.subr.mxu0 0.0
        %672 = vmatpush1.msra.mxu0 0.0
        %673 = vmatprep.subr.mxu0 0.0
        %674 = vmatpush1.msra.mxu0 0.0
        %675 = vmatprep.subr.mxu0 0.0
        %676 = vmatpush1.msra.mxu0 0.0
        %677 = vmatprep.subr.mxu0 0.0
        %678 = vmatpush1.msra.mxu0 0.0
        %679 = vmatprep.subr.mxu0 0.0
        %680 = vmatpush1.msra.mxu0 0.0
        %681 = vmatprep.subr.mxu0 0.0
        %682 = vmatpush1.msra.mxu0 0.0
        %683 = vmatprep.subr.mxu0 0.0
        %684 = vmatpush1.msra.mxu0 0.0
        %685 = vmatprep.mubr.f32.mxu0 0.0
        %686 = vmatmul.mubr.f32.gmra.mrb[0].mxu0 %v619
        %v687 = vpop.f32.mrb[0].mxu0
        %v688 = vadd.f32 %v610, %v687
        %v689 = vpop.f32.mrb[0].mxu0
        %v690 = vadd.f32 %v614, %v689
        %691 = vdwg.mxu0
        %v692 = vadd.f32 %v688, 1.0
        %v693 = vlaneseq
        %v694 = vshrl.u32 %v693, 7
        %v695 = vsub.s32 0, %v694
        %v696 = vrot.slane %v692, %v695
        %v697 = vmul.f32 %v586, %v696
        %v698 = vmul.f32 %v587, %v696
        %v699 = vlaneseq
        %v700 = vshrl.u32 %v699, 7
        %v701 = vsub.s32 0, %v700
        %v702 = vrot.slane %v690, %v701
        %v703 = vadd.f32 %v697, %v702
        %v704 = vadd.f32 %v698, %v702
        %v707 = vcombine.high %v703, %v703
        %v708 = vcombine.high %v704, %v704
        %v710 = vrot.slane 0.0, 7
        %v711 = vrot.slane %v703, 7
        %v712 = vrot.slane %v707, 7
        %v713 = vrot.slane %v704, 7
        %v714 = vrot.slane %v708, 7
        %vm720 = vcmask 1040384
        %v721 = vsel %vm720, 0.0, %v710
        %v722 = vsel %vm720, 0.0, %v711
        %v723 = vsel %vm720, 0.0, %v712
        %v724 = vsel %vm720, 0.0, %v713
        %v725 = vsel %vm720, 0.0, %v714
        %vm726 = vcmask 1044480
        %v727 = vsel %vm726, %v721, 0.0
        %v728 = vsel %vm726, %v722, 0.0
        %v729 = vsel %vm726, %v723, 0.0
        %v730 = vsel %vm726, %v724, 0.0
        %v731 = vsel %vm726, %v725, 0.0
        %v736 = vrot.slane %v727, 1
        %v737 = vrot.slane %v728, 1
        %v738 = vrot.slane %v729, 1
        %v739 = vrot.slane %v730, 1
        %v740 = vrot.slane %v727, 2
        %v741 = vrot.slane %v728, 2
        %v742 = vrot.slane %v729, 2
        %v743 = vrot.slane %v730, 2
        %v745 = vrot.slane %v731, 1
        %v746 = vrot.slane %v731, 2
        %v747 = vcombine.low %v727, %v736
        %v748 = vcombine.low %v740, %v728
        %v749 = vcombine.low %v737, %v741
        %v750 = vcombine.low %v729, %v738
        %v751 = vcombine.low %v728, %v737
        %v752 = vcombine.low %v741, %v729
        %v753 = vcombine.low %v738, %v742
        %v754 = vcombine.low %v730, %v739
        %v755 = vcombine.low %v742, %v730
        %v756 = vcombine.low %v739, %v743
        %v757 = vcombine.low %v731, %v745
        %v758 = vcombine.low %v743, %v731
        %v759 = vcombine.low %v745, %v746
        %v760 = vcombine.low %v747, %v751
        %v761 = vcombine.high %v747, %v751
        %v762 = vcombine.low %v748, %v752
        %v763 = vcombine.high %v748, %v752
        %v764 = vcombine.low %v749, %v753
        %v765 = vcombine.high %v749, %v753
        %v766 = vcombine.low %v750, %v754
        %v767 = vcombine.high %v750, %v754
        %v768 = vcombine.low %v742, %v743
        %v769 = vcombine.low %v755, %v758
        %v770 = vcombine.high %v755, %v758
        %v771 = vcombine.low %v756, %v759
        %v772 = vcombine.high %v756, %v759
        %v773 = vcombine.low %v757, %v747
        %v774 = vcombine.high %v757, %v747
        %v775 = vcombine.low %v746, %v740
        %v792 = vpack.c.bf16 %v766, %v760
        %v793 = vpack.c.bf16 %v767, %v761
        %v794 = vpack.c.bf16 %v769, %v762
        %v795 = vpack.c.bf16 %v770, %v763
        %v796 = vpack.c.bf16 %v771, %v764
        %v797 = vpack.c.bf16 %v772, %v765
        %v798 = vpack.c.bf16 %v773, %v766
        %v799 = vpack.c.bf16 %v774, %v767
        %v800 = vpack.c.bf16 %v775, %v768
        %v801 = vld [vmem:[#allocation7] sm:$0xf]
        %v802 = vld [vmem:[#allocation7 + $0x4] sm:$0xf]
        %v803 = vld [vmem:[#allocation7 + $0x8] sm:$0xf]
        %v804 = vld [vmem:[#allocation7 + $0xc] sm:$0xf]
        %v805 = vld [vmem:[#allocation7 + $0x10] sm:$0xf]
        %v806 = vld [vmem:[#allocation7 + $0x14] sm:$0xf]
        %v807 = vld [vmem:[#allocation7 + $0x18] sm:$0xf]
        %v808 = vld [vmem:[#allocation7 + $0x1c] sm:$0xf]
        %v809 = vld [vmem:[#allocation7 + $0x20] sm:$0xf]
        %v810 = vld [vmem:[#allocation7 + $0x24] sm:$0xf]
        %v811 = vld [vmem:[#allocation7 + $0x28] sm:$0xf]
        %v812 = vld [vmem:[#allocation7 + $0x2c] sm:$0xf]
        %v813 = vld [vmem:[#allocation7 + $0x30] sm:$0xf]
        %v814 = vld [vmem:[#allocation7 + $0x34] sm:$0xf]
        %v815 = vld [vmem:[#allocation7 + $0x38] sm:$0xf]
        %v816 = vld [vmem:[#allocation7 + $0x3c] sm:$0xf]
        %v817 = vld [vmem:[#allocation7 + $0x40] sm:$0xf]
        %v818 = vld [vmem:[#allocation7 + $0x44] sm:$0xf]
        %v819 = vld [vmem:[#allocation7 + $0x48] sm:$0xf]
        %v820 = vld [vmem:[#allocation7 + $0x4c] sm:$0xf]
        %v821 = vld [vmem:[#allocation7 + $0x50] sm:$0xf]
        %v822 = vld [vmem:[#allocation7 + $0x54] sm:$0xf]
        %v823 = vld [vmem:[#allocation7 + $0x58] sm:$0xf]
        %v824 = vld [vmem:[#allocation7 + $0x5c] sm:$0xf]
        %v825 = vld [vmem:[#allocation7 + $0x60] sm:$0xf]
        %v826 = vld [vmem:[#allocation7 + $0x64] sm:$0xf]
        %v827 = vld [vmem:[#allocation7 + $0x68] sm:$0xf]
        %v828 = vld [vmem:[#allocation7 + $0x6c] sm:$0xf]
        %v829 = vld [vmem:[#allocation7 + $0x70] sm:$0xf]
        %v830 = vld [vmem:[#allocation7 + $0x74] sm:$0xf]
        %v831 = vld [vmem:[#allocation7 + $0x78] sm:$0xf]
        %v832 = vld [vmem:[#allocation7 + $0x7c] sm:$0xf]
        %v833 = vld [vmem:[#allocation7 + $0x80] sm:$0xf]
        %v834 = vld [vmem:[#allocation7 + $0x84] sm:$0xf]
        %v835 = vld [vmem:[#allocation7 + $0x88] sm:$0xf]
        %v836 = vld [vmem:[#allocation7 + $0x8c] sm:$0xf]
        %v837 = vld [vmem:[#allocation7 + $0x90] sm:$0xf]
        %v838 = vld [vmem:[#allocation7 + $0x94] sm:$0xf]
        %v839 = vld [vmem:[#allocation7 + $0x98] sm:$0xf]
        %v840 = vld [vmem:[#allocation7 + $0x9c] sm:$0xf]
        %v841 = vld [vmem:[#allocation7 + $0xa0] sm:$0xf]
        %v842 = vld [vmem:[#allocation7 + $0xa4] sm:$0xf]
        %v843 = vld [vmem:[#allocation7 + $0xa8] sm:$0xf]
        %v844 = vld [vmem:[#allocation7 + $0xac] sm:$0xf]
        %v845 = vld [vmem:[#allocation7 + $0xb0] sm:$0xf]
        %v846 = vld [vmem:[#allocation7 + $0xb4] sm:$0xf]
        %v847 = vld [vmem:[#allocation7 + $0xb8] sm:$0xf]
        %v848 = vld [vmem:[#allocation7 + $0xbc] sm:$0xf]
        %v849 = vld [vmem:[#allocation7 + $0xc0] sm:$0xf]
        %v850 = vld [vmem:[#allocation7 + $0xc4] sm:$0xf]
        %v851 = vld [vmem:[#allocation7 + $0xc8] sm:$0xf]
        %v852 = vld [vmem:[#allocation7 + $0xcc] sm:$0xf]
        %v853 = vld [vmem:[#allocation7 + $0xd0] sm:$0xf]
        %v854 = vld [vmem:[#allocation7 + $0xd4] sm:$0xf]
        %v855 = vld [vmem:[#allocation7 + $0xd8] sm:$0xf]
        %v856 = vld [vmem:[#allocation7 + $0xdc] sm:$0xf]
        %v857 = vld [vmem:[#allocation7 + $0xe0] sm:$0xf]
        %v858 = vld [vmem:[#allocation7 + $0xe4] sm:$0xf]
        %v859 = vld [vmem:[#allocation7 + $0xe8] sm:$0xf]
        %v860 = vld [vmem:[#allocation7 + $0xec] sm:$0xf]
        %v861 = vld [vmem:[#allocation7 + $0xf0] sm:$0xf]
        %v862 = vld [vmem:[#allocation7 + $0xf4] sm:$0xf]
        %v863 = vld [vmem:[#allocation7 + $0xf8] sm:$0xf]
        %v864 = vld [vmem:[#allocation7 + $0xfc] sm:$0xf]
        %v865 = vld [vmem:[#allocation7 + $0x100] sm:$0xf]
        %v866 = vld [vmem:[#allocation7 + $0x104] sm:$0xf]
        %v867 = vld [vmem:[#allocation7 + $0x108] sm:$0xf]
        %v868 = vld [vmem:[#allocation7 + $0x10c] sm:$0xf]
        %v869 = vld [vmem:[#allocation7 + $0x110] sm:$0xf]
        %v870 = vld [vmem:[#allocation7 + $0x114] sm:$0xf]
        %v871 = vld [vmem:[#allocation7 + $0x118] sm:$0xf]
        %v872 = vld [vmem:[#allocation7 + $0x11c] sm:$0xf]
        %v873 = vld [vmem:[#allocation7 + $0x120] sm:$0xf]
        %v874 = vld [vmem:[#allocation7 + $0x124] sm:$0xf]
        %v875 = vld [vmem:[#allocation7 + $0x128] sm:$0xf]
        %v876 = vld [vmem:[#allocation7 + $0x12c] sm:$0xf]
        %v877 = vld [vmem:[#allocation7 + $0x130] sm:$0xf]
        %v878 = vld [vmem:[#allocation7 + $0x134] sm:$0xf]
        %v879 = vld [vmem:[#allocation7 + $0x138] sm:$0xf]
        %v880 = vld [vmem:[#allocation7 + $0x13c] sm:$0xf]
        %v881 = vld [vmem:[#allocation7 + $0x140] sm:$0xf]
        %v882 = vld [vmem:[#allocation7 + $0x144] sm:$0xf]
        %v883 = vld [vmem:[#allocation7 + $0x148] sm:$0xf]
        %v884 = vld [vmem:[#allocation7 + $0x14c] sm:$0xf]
        %v885 = vld [vmem:[#allocation7 + $0x150] sm:$0xf]
        %v886 = vld [vmem:[#allocation7 + $0x154] sm:$0xf]
        %v887 = vld [vmem:[#allocation7 + $0x158] sm:$0xf]
        %v888 = vld [vmem:[#allocation7 + $0x15c] sm:$0xf]
        %v889 = vld [vmem:[#allocation7 + $0x160] sm:$0xf]
        %v890 = vld [vmem:[#allocation7 + $0x164] sm:$0xf]
        %v891 = vld [vmem:[#allocation7 + $0x168] sm:$0xf]
        %v892 = vld [vmem:[#allocation7 + $0x16c] sm:$0xf]
        %v893 = vld [vmem:[#allocation7 + $0x170] sm:$0xf]
        %v894 = vld [vmem:[#allocation7 + $0x174] sm:$0xf]
        %v895 = vld [vmem:[#allocation7 + $0x178] sm:$0xf]
        %v896 = vld [vmem:[#allocation7 + $0x17c] sm:$0xf]
        %v897 = vld [vmem:[#allocation7 + $0x180] sm:$0xf]
        %v898 = vld [vmem:[#allocation7 + $0x184] sm:$0xf]
        %v899 = vld [vmem:[#allocation7 + $0x188] sm:$0xf]
        %v900 = vld [vmem:[#allocation7 + $0x18c] sm:$0xf]
        %v901 = vld [vmem:[#allocation7 + $0x190] sm:$0xf]
        %v902 = vld [vmem:[#allocation7 + $0x194] sm:$0xf]
        %v903 = vld [vmem:[#allocation7 + $0x198] sm:$0xf]
        %v904 = vld [vmem:[#allocation7 + $0x19c] sm:$0xf]
        %v905 = vld [vmem:[#allocation7 + $0x1a0] sm:$0xf]
        %v906 = vld [vmem:[#allocation7 + $0x1a4] sm:$0xf]
        %v907 = vld [vmem:[#allocation7 + $0x1a8] sm:$0xf]
        %v908 = vld [vmem:[#allocation7 + $0x1ac] sm:$0xf]
        %v909 = vld [vmem:[#allocation7 + $0x1b0] sm:$0xf]
        %v910 = vld [vmem:[#allocation7 + $0x1b4] sm:$0xf]
        %v911 = vld [vmem:[#allocation7 + $0x1b8] sm:$0xf]
        %v912 = vld [vmem:[#allocation7 + $0x1bc] sm:$0xf]
        %v913 = vld [vmem:[#allocation7 + $0x1c0] sm:$0xf]
        %v914 = vld [vmem:[#allocation7 + $0x1c4] sm:$0xf]
        %v915 = vld [vmem:[#allocation7 + $0x1c8] sm:$0xf]
        %v916 = vld [vmem:[#allocation7 + $0x1cc] sm:$0xf]
        %v917 = vld [vmem:[#allocation7 + $0x1d0] sm:$0xf]
        %v918 = vld [vmem:[#allocation7 + $0x1d4] sm:$0xf]
        %v919 = vld [vmem:[#allocation7 + $0x1d8] sm:$0xf]
        %v920 = vld [vmem:[#allocation7 + $0x1dc] sm:$0xf]
        %v921 = vld [vmem:[#allocation7 + $0x1e0] sm:$0xf]
        %v922 = vld [vmem:[#allocation7 + $0x1e4] sm:$0xf]
        %v923 = vld [vmem:[#allocation7 + $0x1e8] sm:$0xf]
        %v924 = vld [vmem:[#allocation7 + $0x1ec] sm:$0xf]
        %v925 = vld [vmem:[#allocation7 + $0x1f0] sm:$0xf]
        %v926 = vld [vmem:[#allocation7 + $0x1f4] sm:$0xf]
        %v927 = vld [vmem:[#allocation7 + $0x1f8] sm:$0xf]
        %v928 = vld [vmem:[#allocation7 + $0x1fc] sm:$0xf]
        %v929 = vld [vmem:[#allocation7 + $0x200] sm:$0xf]
        %v930 = vld [vmem:[#allocation7 + $0x204] sm:$0xf]
        %v931 = vld [vmem:[#allocation7 + $0x208] sm:$0xf]
        %v932 = vld [vmem:[#allocation7 + $0x20c] sm:$0xf]
        %v933 = vld [vmem:[#allocation7 + $0x210] sm:$0xf]
        %v934 = vld [vmem:[#allocation7 + $0x214] sm:$0xf]
        %v935 = vld [vmem:[#allocation7 + $0x218] sm:$0xf]
        %v936 = vld [vmem:[#allocation7 + $0x21c] sm:$0xf]
        %v937 = vld [vmem:[#allocation7 + $0x220] sm:$0xf]
        %v938 = vld [vmem:[#allocation7 + $0x224] sm:$0xf]
        %v939 = vld [vmem:[#allocation7 + $0x228] sm:$0xf]
        %v940 = vld [vmem:[#allocation7 + $0x22c] sm:$0xf]
        %v941 = vld [vmem:[#allocation7 + $0x230] sm:$0xf]
        %v942 = vld [vmem:[#allocation7 + $0x234] sm:$0xf]
        %v943 = vld [vmem:[#allocation7 + $0x238] sm:$0xf]
        %v944 = vld [vmem:[#allocation7 + $0x23c] sm:$0xf]
        %v1089 = vunpack.c.l.b16 %v801
        %v1090 = vunpack.c.l.b16 %v802
        %v1091 = vunpack.c.l.b16 %v803
        %v1092 = vunpack.c.l.b16 %v804
        %v1093 = vunpack.c.l.b16 %v805
        %v1094 = vunpack.c.l.b16 %v806
        %v1095 = vunpack.c.l.b16 %v807
        %v1096 = vunpack.c.l.b16 %v808
        %v1097 = vunpack.c.l.b16 %v809
        %v1098 = vunpack.c.l.b16 %v810
        %v1099 = vunpack.c.l.b16 %v811
        %v1100 = vunpack.c.l.b16 %v812
        %v1101 = vunpack.c.l.b16 %v813
        %v1102 = vunpack.c.l.b16 %v814
        %v1103 = vunpack.c.l.b16 %v815
        %v1104 = vunpack.c.l.b16 %v816
        %v1105 = vunpack.c.l.b16 %v817
        %v1106 = vunpack.c.l.b16 %v818
        %v1107 = vunpack.c.l.b16 %v819
        %v1108 = vunpack.c.l.b16 %v820
        %v1109 = vunpack.c.l.b16 %v821
        %v1110 = vunpack.c.l.b16 %v822
        %v1111 = vunpack.c.l.b16 %v823
        %v1112 = vunpack.c.l.b16 %v824
        %v1113 = vunpack.c.l.b16 %v825
        %v1114 = vunpack.c.l.b16 %v826
        %v1115 = vunpack.c.l.b16 %v827
        %v1116 = vunpack.c.l.b16 %v828
        %v1117 = vunpack.c.l.b16 %v829
        %v1118 = vunpack.c.l.b16 %v830
        %v1119 = vunpack.c.l.b16 %v831
        %v1120 = vunpack.c.l.b16 %v832
        %v1121 = vunpack.c.l.b16 %v833
        %v1122 = vunpack.c.l.b16 %v834
        %v1123 = vunpack.c.l.b16 %v835
        %v1124 = vunpack.c.l.b16 %v836
        %v1125 = vunpack.c.l.b16 %v837
        %v1126 = vunpack.c.l.b16 %v838
        %v1127 = vunpack.c.l.b16 %v839
        %v1128 = vunpack.c.l.b16 %v840
        %v1129 = vunpack.c.l.b16 %v841
        %v1130 = vunpack.c.l.b16 %v842
        %v1131 = vunpack.c.l.b16 %v843
        %v1132 = vunpack.c.l.b16 %v844
        %v1133 = vunpack.c.l.b16 %v845
        %v1134 = vunpack.c.l.b16 %v846
        %v1135 = vunpack.c.l.b16 %v847
        %v1136 = vunpack.c.l.b16 %v848
        %v1137 = vunpack.c.l.b16 %v849
        %v1138 = vunpack.c.l.b16 %v850
        %v1139 = vunpack.c.l.b16 %v851
        %v1140 = vunpack.c.l.b16 %v852
        %v1141 = vunpack.c.l.b16 %v853
        %v1142 = vunpack.c.l.b16 %v854
        %v1143 = vunpack.c.l.b16 %v855
        %v1144 = vunpack.c.l.b16 %v856
        %v1145 = vunpack.c.l.b16 %v857
        %v1146 = vunpack.c.l.b16 %v858
        %v1147 = vunpack.c.l.b16 %v859
        %v1148 = vunpack.c.l.b16 %v860
        %v1149 = vunpack.c.l.b16 %v861
        %v1150 = vunpack.c.l.b16 %v862
        %v1151 = vunpack.c.l.b16 %v863
        %v1152 = vunpack.c.l.b16 %v864
        %v1153 = vunpack.c.l.b16 %v865
        %v1154 = vunpack.c.l.b16 %v866
        %v1155 = vunpack.c.l.b16 %v867
        %v1156 = vunpack.c.l.b16 %v868
        %v1157 = vunpack.c.l.b16 %v869
        %v1158 = vunpack.c.l.b16 %v870
        %v1159 = vunpack.c.l.b16 %v871
        %v1160 = vunpack.c.l.b16 %v872
        %v1161 = vunpack.c.l.b16 %v873
        %v1162 = vunpack.c.l.b16 %v874
        %v1163 = vunpack.c.l.b16 %v875
        %v1164 = vunpack.c.l.b16 %v876
        %v1165 = vunpack.c.l.b16 %v877
        %v1166 = vunpack.c.l.b16 %v878
        %v1167 = vunpack.c.l.b16 %v879
        %v1168 = vunpack.c.l.b16 %v880
        %v1169 = vunpack.c.l.b16 %v881
        %v1170 = vunpack.c.l.b16 %v882
        %v1171 = vunpack.c.l.b16 %v883
        %v1172 = vunpack.c.l.b16 %v884
        %v1173 = vunpack.c.l.b16 %v885
        %v1174 = vunpack.c.l.b16 %v886
        %v1175 = vunpack.c.l.b16 %v887
        %v1176 = vunpack.c.l.b16 %v888
        %v1177 = vunpack.c.l.b16 %v889
        %v1178 = vunpack.c.l.b16 %v890
        %v1179 = vunpack.c.l.b16 %v891
        %v1180 = vunpack.c.l.b16 %v892
        %v1181 = vunpack.c.l.b16 %v893
        %v1182 = vunpack.c.l.b16 %v894
        %v1183 = vunpack.c.l.b16 %v895
        %v1184 = vunpack.c.l.b16 %v896
        %v1185 = vunpack.c.l.b16 %v897
        %v1186 = vunpack.c.l.b16 %v898
        %v1187 = vunpack.c.l.b16 %v899
        %v1188 = vunpack.c.l.b16 %v900
        %v1189 = vunpack.c.l.b16 %v901
        %v1190 = vunpack.c.l.b16 %v902
        %v1191 = vunpack.c.l.b16 %v903
        %v1192 = vunpack.c.l.b16 %v904
        %v1193 = vunpack.c.l.b16 %v905
        %v1194 = vunpack.c.l.b16 %v906
        %v1195 = vunpack.c.l.b16 %v907
        %v1196 = vunpack.c.l.b16 %v908
        %v1197 = vunpack.c.l.b16 %v909
        %v1198 = vunpack.c.l.b16 %v910
        %v1199 = vunpack.c.l.b16 %v911
        %v1200 = vunpack.c.l.b16 %v912
        %v1201 = vunpack.c.l.b16 %v913
        %v1202 = vunpack.c.l.b16 %v914
        %v1203 = vunpack.c.l.b16 %v915
        %v1204 = vunpack.c.l.b16 %v916
        %v1205 = vunpack.c.l.b16 %v917
        %v1206 = vunpack.c.l.b16 %v918
        %v1207 = vunpack.c.l.b16 %v919
        %v1208 = vunpack.c.l.b16 %v920
        %v1209 = vunpack.c.l.b16 %v921
        %v1210 = vunpack.c.l.b16 %v922
        %v1211 = vunpack.c.l.b16 %v923
        %v1212 = vunpack.c.l.b16 %v924
        %v1213 = vunpack.c.l.b16 %v925
        %v1214 = vunpack.c.l.b16 %v926
        %v1215 = vunpack.c.l.b16 %v927
        %v1216 = vunpack.c.l.b16 %v928
        %v1217 = vunpack.c.l.b16 %v929
        %v1218 = vunpack.c.l.b16 %v930
        %v1219 = vunpack.c.l.b16 %v931
        %v1220 = vunpack.c.l.b16 %v932
        %v1221 = vunpack.c.l.b16 %v933
        %v1222 = vunpack.c.l.b16 %v934
        %v1223 = vunpack.c.l.b16 %v935
        %v1224 = vunpack.c.l.b16 %v936
        %v1225 = vunpack.c.l.b16 %v937
        %v1226 = vunpack.c.l.b16 %v938
        %v1227 = vunpack.c.l.b16 %v939
        %v1228 = vunpack.c.l.b16 %v940
        %v1229 = vunpack.c.l.b16 %v941
        %v1230 = vunpack.c.l.b16 %v942
        %v1231 = vunpack.c.l.b16 %v943
        %v1232 = vunpack.c.l.b16 %v944
        %v1233 = vpack.c.b16 %v1090, %v1089
        %v1234 = vpack.c.b16 %v1092, %v1091
        %v1235 = vpack.c.b16 %v1094, %v1093
        %v1236 = vpack.c.b16 %v1096, %v1095
        %v1237 = vpack.c.b16 %v1098, %v1097
        %v1238 = vpack.c.b16 %v1100, %v1099
        %v1239 = vpack.c.b16 %v1102, %v1101
        %v1240 = vpack.c.b16 %v1104, %v1103
        %v1241 = vpack.c.b16 %v1106, %v1105
        %v1242 = vpack.c.b16 %v1108, %v1107
        %v1243 = vpack.c.b16 %v1110, %v1109
        %v1244 = vpack.c.b16 %v1112, %v1111
        %v1245 = vpack.c.b16 %v1114, %v1113
        %v1246 = vpack.c.b16 %v1116, %v1115
        %v1247 = vpack.c.b16 %v1118, %v1117
        %v1248 = vpack.c.b16 %v1120, %v1119
        %v1249 = vpack.c.b16 %v1122, %v1121
        %v1250 = vpack.c.b16 %v1124, %v1123
        %v1251 = vpack.c.b16 %v1126, %v1125
        %v1252 = vpack.c.b16 %v1128, %v1127
        %v1253 = vpack.c.b16 %v1130, %v1129
        %v1254 = vpack.c.b16 %v1132, %v1131
        %v1255 = vpack.c.b16 %v1134, %v1133
        %v1256 = vpack.c.b16 %v1136, %v1135
        %v1257 = vpack.c.b16 %v1138, %v1137
        %v1258 = vpack.c.b16 %v1140, %v1139
        %v1259 = vpack.c.b16 %v1142, %v1141
        %v1260 = vpack.c.b16 %v1144, %v1143
        %v1261 = vpack.c.b16 %v1146, %v1145
        %v1262 = vpack.c.b16 %v1148, %v1147
        %v1263 = vpack.c.b16 %v1150, %v1149
        %v1264 = vpack.c.b16 %v1152, %v1151
        %v1265 = vpack.c.b16 %v1154, %v1153
        %v1266 = vpack.c.b16 %v1156, %v1155
        %v1267 = vpack.c.b16 %v1158, %v1157
        %v1268 = vpack.c.b16 %v1160, %v1159
        %v1269 = vpack.c.b16 %v1162, %v1161
        %v1270 = vpack.c.b16 %v1164, %v1163
        %v1271 = vpack.c.b16 %v1166, %v1165
        %v1272 = vpack.c.b16 %v1168, %v1167
        %v1273 = vpack.c.b16 %v1170, %v1169
        %v1274 = vpack.c.b16 %v1172, %v1171
        %v1275 = vpack.c.b16 %v1174, %v1173
        %v1276 = vpack.c.b16 %v1176, %v1175
        %v1277 = vpack.c.b16 %v1178, %v1177
        %v1278 = vpack.c.b16 %v1180, %v1179
        %v1279 = vpack.c.b16 %v1182, %v1181
        %v1280 = vpack.c.b16 %v1184, %v1183
        %v1281 = vpack.c.b16 %v1186, %v1185
        %v1282 = vpack.c.b16 %v1188, %v1187
        %v1283 = vpack.c.b16 %v1190, %v1189
        %v1284 = vpack.c.b16 %v1192, %v1191
        %v1285 = vpack.c.b16 %v1194, %v1193
        %v1286 = vpack.c.b16 %v1196, %v1195
        %v1287 = vpack.c.b16 %v1198, %v1197
        %v1288 = vpack.c.b16 %v1200, %v1199
        %v1289 = vpack.c.b16 %v1202, %v1201
        %v1290 = vpack.c.b16 %v1204, %v1203
        %v1291 = vpack.c.b16 %v1206, %v1205
        %v1292 = vpack.c.b16 %v1208, %v1207
        %v1293 = vpack.c.b16 %v1210, %v1209
        %v1294 = vpack.c.b16 %v1212, %v1211
        %v1295 = vpack.c.b16 %v1214, %v1213
        %v1296 = vpack.c.b16 %v1216, %v1215
        %v1297 = vpack.c.b16 %v1218, %v1217
        %v1298 = vpack.c.b16 %v1220, %v1219
        %v1299 = vpack.c.b16 %v1222, %v1221
        %v1300 = vpack.c.b16 %v1224, %v1223
        %v1301 = vpack.c.b16 %v1226, %v1225
        %v1302 = vpack.c.b16 %v1228, %v1227
        %v1303 = vpack.c.b16 %v1230, %v1229
        %v1304 = vpack.c.b16 %v1232, %v1231
        %1377 = vmatprep.subr.bf16.mxu0 0
        %1378 = vmatpush1.bf16.msra.mxu0 %v1233
        %1379 = vmatprep.subr.bf16.mxu0 0
        %1380 = vmatpush1.bf16.msra.mxu0 %v1234
        %1381 = vmatprep.subr.bf16.mxu0 0
        %1382 = vmatpush1.bf16.msra.mxu0 %v1235
        %1383 = vmatprep.subr.bf16.mxu0 0
        %1384 = vmatpush1.bf16.msra.mxu0 %v1236
        %1385 = vmatprep.subr.bf16.mxu0 0
        %1386 = vmatpush1.bf16.msra.mxu0 %v1237
        %1387 = vmatprep.subr.bf16.mxu0 0
        %1388 = vmatpush1.bf16.msra.mxu0 %v1238
        %1389 = vmatprep.subr.bf16.mxu0 0
        %1390 = vmatpush1.bf16.msra.mxu0 %v1239
        %1391 = vmatprep.subr.bf16.mxu0 0
        %1392 = vmatpush1.bf16.msra.mxu0 %v1240
        %1393 = vmatprep.subr.bf16.mxu0 0
        %1394 = vmatpush1.bf16.msra.mxu0 %v1241
        %1395 = vmatprep.subr.bf16.mxu0 0
        %1396 = vmatpush1.bf16.msra.mxu0 %v1242
        %1397 = vmatprep.subr.bf16.mxu0 0
        %1398 = vmatpush1.bf16.msra.mxu0 %v1243
        %1399 = vmatprep.subr.bf16.mxu0 0
        %1400 = vmatpush1.bf16.msra.mxu0 %v1244
        %1401 = vmatprep.subr.bf16.mxu0 0
        %1402 = vmatpush1.bf16.msra.mxu0 %v1245
        %1403 = vmatprep.subr.bf16.mxu0 0
        %1404 = vmatpush1.bf16.msra.mxu0 %v1246
        %1405 = vmatprep.subr.bf16.mxu0 0
        %1406 = vmatpush1.bf16.msra.mxu0 %v1247
        %1407 = vmatprep.subr.bf16.mxu0 0
        %1408 = vmatpush1.bf16.msra.mxu0 %v1248
        %1409 = vmatprep.mubr.bf16.mxu0 %v793
        %1410 = vmatmul.mubr.bf16.gmra.mrb[0].mxu0 %v792
        %v1411 = vpop.f32.mrb[0].mxu0
        %v1412 = vadd.f32 0.0, %v1411
        %v1413 = vpop.f32.mrb[0].mxu0
        %v1414 = vpop.f32.mrb[0].mxu0
        %v1415 = vadd.f32 0.0, %v1414
        %v1416 = vpop.f32.mrb[0].mxu0
        %1417 = vdwg.mxu0
        %1418 = vmatprep.subr.bf16.mxu0 0
        %1419 = vmatpush1.bf16.msra.mxu0 %v1249
        %1420 = vmatprep.subr.bf16.mxu0 0
        %1421 = vmatpush1.bf16.msra.mxu0 %v1250
        %1422 = vmatprep.subr.bf16.mxu0 0
        %1423 = vmatpush1.bf16.msra.mxu0 %v1251
        %1424 = vmatprep.subr.bf16.mxu0 0
        %1425 = vmatpush1.bf16.msra.mxu0 %v1252
        %1426 = vmatprep.subr.bf16.mxu0 0
        %1427 = vmatpush1.bf16.msra.mxu0 %v1253
        %1428 = vmatprep.subr.bf16.mxu0 0
        %1429 = vmatpush1.bf16.msra.mxu0 %v1254
        %1430 = vmatprep.subr.bf16.mxu0 0
        %1431 = vmatpush1.bf16.msra.mxu0 %v1255
        %1432 = vmatprep.subr.bf16.mxu0 0
        %1433 = vmatpush1.bf16.msra.mxu0 %v1256
        %1434 = vmatprep.subr.bf16.mxu0 0
        %1435 = vmatpush1.bf16.msra.mxu0 %v1257
        %1436 = vmatprep.subr.bf16.mxu0 0
        %1437 = vmatpush1.bf16.msra.mxu0 %v1258
        %1438 = vmatprep.subr.bf16.mxu0 0
        %1439 = vmatpush1.bf16.msra.mxu0 %v1259
        %1440 = vmatprep.subr.bf16.mxu0 0
        %1441 = vmatpush1.bf16.msra.mxu0 %v1260
        %1442 = vmatprep.subr.bf16.mxu0 0
        %1443 = vmatpush1.bf16.msra.mxu0 %v1261
        %1444 = vmatprep.subr.bf16.mxu0 0
        %1445 = vmatpush1.bf16.msra.mxu0 %v1262
        %1446 = vmatprep.subr.bf16.mxu0 0
        %1447 = vmatpush1.bf16.msra.mxu0 %v1263
        %1448 = vmatprep.subr.bf16.mxu0 0
        %1449 = vmatpush1.bf16.msra.mxu0 %v1264
        %1450 = vmatprep.mubr.bf16.mxu0 %v795
        %1451 = vmatmul.mubr.bf16.gmra.mrb[0].mxu0 %v794
        %v1452 = vpop.f32.mrb[0].mxu0
        %v1453 = vadd.f32 %v1412, %v1452
        %v1454 = vpop.f32.mrb[0].mxu0
        %v1455 = vpop.f32.mrb[0].mxu0
        %v1456 = vadd.f32 %v1415, %v1455
        %v1457 = vpop.f32.mrb[0].mxu0
        %1458 = vdwg.mxu0
        %1459 = vmatprep.subr.bf16.mxu0 0
        %1460 = vmatpush1.bf16.msra.mxu0 %v1265
        %1461 = vmatprep.subr.bf16.mxu0 0
        %1462 = vmatpush1.bf16.msra.mxu0 %v1266
        %1463 = vmatprep.subr.bf16.mxu0 0
        %1464 = vmatpush1.bf16.msra.mxu0 %v1267
        %1465 = vmatprep.subr.bf16.mxu0 0
        %1466 = vmatpush1.bf16.msra.mxu0 %v1268
        %1467 = vmatprep.subr.bf16.mxu0 0
        %1468 = vmatpush1.bf16.msra.mxu0 %v1269
        %1469 = vmatprep.subr.bf16.mxu0 0
        %1470 = vmatpush1.bf16.msra.mxu0 %v1270
        %1471 = vmatprep.subr.bf16.mxu0 0
        %1472 = vmatpush1.bf16.msra.mxu0 %v1271
        %1473 = vmatprep.subr.bf16.mxu0 0
        %1474 = vmatpush1.bf16.msra.mxu0 %v1272
        %1475 = vmatprep.subr.bf16.mxu0 0
        %1476 = vmatpush1.bf16.msra.mxu0 %v1273
        %1477 = vmatprep.subr.bf16.mxu0 0
        %1478 = vmatpush1.bf16.msra.mxu0 %v1274
        %1479 = vmatprep.subr.bf16.mxu0 0
        %1480 = vmatpush1.bf16.msra.mxu0 %v1275
        %1481 = vmatprep.subr.bf16.mxu0 0
        %1482 = vmatpush1.bf16.msra.mxu0 %v1276
        %1483 = vmatprep.subr.bf16.mxu0 0
        %1484 = vmatpush1.bf16.msra.mxu0 %v1277
        %1485 = vmatprep.subr.bf16.mxu0 0
        %1486 = vmatpush1.bf16.msra.mxu0 %v1278
        %1487 = vmatprep.subr.bf16.mxu0 0
        %1488 = vmatpush1.bf16.msra.mxu0 %v1279
        %1489 = vmatprep.subr.bf16.mxu0 0
        %1490 = vmatpush1.bf16.msra.mxu0 %v1280
        %1491 = vmatprep.mubr.bf16.mxu0 %v797
        %1492 = vmatmul.mubr.bf16.gmra.mrb[0].mxu0 %v796
        %v1493 = vpop.f32.mrb[0].mxu0
        %v1494 = vadd.f32 %v1453, %v1493
        %v1495 = vpop.f32.mrb[0].mxu0
        %v1496 = vpop.f32.mrb[0].mxu0
        %v1497 = vadd.f32 %v1456, %v1496
        %v1498 = vpop.f32.mrb[0].mxu0
        %1499 = vdwg.mxu0
        %1500 = vmatprep.subr.bf16.mxu0 0
        %1501 = vmatpush1.bf16.msra.mxu0 %v1281
        %1502 = vmatprep.subr.bf16.mxu0 0
        %1503 = vmatpush1.bf16.msra.mxu0 %v1282
        %1504 = vmatprep.subr.bf16.mxu0 0
        %1505 = vmatpush1.bf16.msra.mxu0 %v1283
        %1506 = vmatprep.subr.bf16.mxu0 0
        %1507 = vmatpush1.bf16.msra.mxu0 %v1284
        %1508 = vmatprep.subr.bf16.mxu0 0
        %1509 = vmatpush1.bf16.msra.mxu0 %v1285
        %1510 = vmatprep.subr.bf16.mxu0 0
        %1511 = vmatpush1.bf16.msra.mxu0 %v1286
        %1512 = vmatprep.subr.bf16.mxu0 0
        %1513 = vmatpush1.bf16.msra.mxu0 %v1287
        %1514 = vmatprep.subr.bf16.mxu0 0
        %1515 = vmatpush1.bf16.msra.mxu0 %v1288
        %1516 = vmatprep.subr.bf16.mxu0 0
        %1517 = vmatpush1.bf16.msra.mxu0 %v1289
        %1518 = vmatprep.subr.bf16.mxu0 0
        %1519 = vmatpush1.bf16.msra.mxu0 %v1290
        %1520 = vmatprep.subr.bf16.mxu0 0
        %1521 = vmatpush1.bf16.msra.mxu0 %v1291
        %1522 = vmatprep.subr.bf16.mxu0 0
        %1523 = vmatpush1.bf16.msra.mxu0 %v1292
        %1524 = vmatprep.subr.bf16.mxu0 0
        %1525 = vmatpush1.bf16.msra.mxu0 %v1293
        %1526 = vmatprep.subr.bf16.mxu0 0
        %1527 = vmatpush1.bf16.msra.mxu0 %v1294
        %1528 = vmatprep.subr.bf16.mxu0 0
        %1529 = vmatpush1.bf16.msra.mxu0 %v1295
        %1530 = vmatprep.subr.bf16.mxu0 0
        %1531 = vmatpush1.bf16.msra.mxu0 %v1296
        %1532 = vmatprep.mubr.bf16.mxu0 %v799
        %1533 = vmatmul.mubr.bf16.gmra.mrb[0].mxu0 %v798
        %v1534 = vpop.f32.mrb[0].mxu0
        %v1535 = vadd.f32 %v1494, %v1534
        %v1536 = vpop.f32.mrb[0].mxu0
        %v1537 = vpop.f32.mrb[0].mxu0
        %v1538 = vadd.f32 %v1497, %v1537
        %v1539 = vpop.f32.mrb[0].mxu0
        %1540 = vdwg.mxu0
        %1541 = vmatprep.subr.bf16.mxu0 0
        %1542 = vmatpush1.bf16.msra.mxu0 %v1297
        %1543 = vmatprep.subr.bf16.mxu0 0
        %1544 = vmatpush1.bf16.msra.mxu0 %v1298
        %1545 = vmatprep.subr.bf16.mxu0 0
        %1546 = vmatpush1.bf16.msra.mxu0 %v1299
        %1547 = vmatprep.subr.bf16.mxu0 0
        %1548 = vmatpush1.bf16.msra.mxu0 %v1300
        %1549 = vmatprep.subr.bf16.mxu0 0
        %1550 = vmatpush1.bf16.msra.mxu0 %v1301
        %1551 = vmatprep.subr.bf16.mxu0 0
        %1552 = vmatpush1.bf16.msra.mxu0 %v1302
        %1553 = vmatprep.subr.bf16.mxu0 0
        %1554 = vmatpush1.bf16.msra.mxu0 %v1303
        %1555 = vmatprep.subr.bf16.mxu0 0
        %1556 = vmatpush1.bf16.msra.mxu0 %v1304
        %1557 = vmatprep.subr.bf16.mxu0 0
        %1558 = vmatpush1.bf16.msra.mxu0 0
        %1559 = vmatprep.subr.bf16.mxu0 0
        %1560 = vmatpush1.bf16.msra.mxu0 0
        %1561 = vmatprep.subr.bf16.mxu0 0
        %1562 = vmatpush1.bf16.msra.mxu0 0
        %1563 = vmatprep.subr.bf16.mxu0 0
        %1564 = vmatpush1.bf16.msra.mxu0 0
        %1565 = vmatprep.subr.bf16.mxu0 0
        %1566 = vmatpush1.bf16.msra.mxu0 0
        %1567 = vmatprep.subr.bf16.mxu0 0
        %1568 = vmatpush1.bf16.msra.mxu0 0
        %1569 = vmatprep.subr.bf16.mxu0 0
        %1570 = vmatpush1.bf16.msra.mxu0 0
        %1571 = vmatprep.subr.bf16.mxu0 0
        %1572 = vmatpush1.bf16.msra.mxu0 0
        %1573 = vmatprep.mubr.bf16.mxu0 0
        %1574 = vmatmul.mubr.bf16.gmra.mrb[0].mxu0 %v800
        %v1575 = vpop.f32.mrb[0].mxu0
        %v1576 = vadd.f32 %v1535, %v1575
        %v1577 = vpop.f32.mrb[0].mxu0
        %v1578 = vpop.f32.mrb[0].mxu0
        %v1579 = vadd.f32 %v1538, %v1578
        %v1580 = vpop.f32.mrb[0].mxu0
        %1581 = vdwg.mxu0
        %v1582 = vld [vmem:[%s12] sm:$0x1]
        %v1584 = vlaneseq
        %v1585 = vshrl.u32 %v1584, 7
        %v1586 = vsub.s32 0, %v1585
        %v1587 = vrot.slane %v1582, %v1586
        %v1589 = vadd.f32 %v1576, %v1587
        %v1590 = vadd.f32 %v1579, %v1587
        %v1591 = vld [vmem:[%s524] sm:$0xff]
        %v1592 = vld [vmem:[%s524 + $0x8] sm:$0xff]
        %v1593 = vld [vmem:[%s4] sm:$0x1]
        %1595 = vset.pattern.permute.xlu0 0
        %1596 = vperm.xlu0 %1595, %v1591
        %v1597 = vpop.permute.xlu0 %1596
        %1600 = vset.pattern.permute.xlu0 0
        %1601 = vperm.xlu0 %1600, %v1592
        %v1602 = vpop.permute.xlu0 %1601
        %v1605 = vlaneseq
        %v1606 = vshrl.u32 %v1605, 7
        %v1607 = vsub.s32 0, %v1606
        %v1608 = vrot.slane %v1593, %v1607
        %v1610 = vmul.f32 %v1597, %v1608
        %v1611 = vmul.f32 %v1602, %v1608
        %v1612 = vadd.f32 %v1589, %v1610
        %v1613 = vadd.f32 %v1590, %v1611
        %v1614 = vmul.f32 %v1612, 0.2
        %v1615 = vmul.f32 %v1613, 0.2
        %v1616 = vmax.f32 %v1612, %v1614
        %v1617 = vmax.f32 %v1613, %v1615
        %v1618 = vadd.f32 %v1616, %v1617
        %v1619 = vrot.slane %v1618, 4
        %v1620 = vadd.f32 %v1618, %v1619
        %v1621 = vrot.slane %v1620, 2
        %v1622 = vadd.f32 %v1620, %v1621
        %v1623 = vrot.slane %v1622, 1
        %v1624 = vadd.f32 %v1622, %v1623
        %v1625 = vmul.f32 %v1624, %v568
        %v1626 = vmul.f32 %v1616, %v1616
        %v1627 = vmul.f32 %v1617, %v1617
        %v1628 = vadd.f32 %v1626, %v1627
        %v1629 = vrot.slane %v1628, 4
        %v1630 = vadd.f32 %v1628, %v1629
        %v1631 = vrot.slane %v1630, 2
        %v1632 = vadd.f32 %v1630, %v1631
        %v1633 = vrot.slane %v1632, 1
        %v1634 = vadd.f32 %v1632, %v1633
        %v1635 = vmul.f32 %v1634, %v568
        %v1636 = vmul.f32 %v1625, %v1625
        %v1637 = vsub.f32 %v1635, %v1636
        %v1638 = vsub.f32 %v1616, %v1625
        %v1639 = vsub.f32 %v1617, %v1625
        %v1640 = vadd.f32 %v1637, 1e-05
        %v1641 = vrsqrt.pop %v1640
        %v1642 = vmul.f32 %v1638, %v1641
        %v1643 = vmul.f32 %v1639, %v1641
        %v1644 = vld [vmem:[%s530] sm:$0x1]
        %v1645 = vld [vmem:[#allocation5] sm:$0xff]
        %v1646 = vld [vmem:[#allocation5 + $0x8] sm:$0xff]
        %v1647 = vld [vmem:[#allocation5 + $0x10] sm:$0xff]
        %v1648 = vld [vmem:[#allocation5 + $0x18] sm:$0xff]
        %v1649 = vld [vmem:[#allocation5 + $0x20] sm:$0xff]
        %v1650 = vld [vmem:[#allocation5 + $0x28] sm:$0xff]
        %v1651 = vld [vmem:[#allocation5 + $0x30] sm:$0xff]
        %v1652 = vld [vmem:[#allocation5 + $0x38] sm:$0xff]
        %v1653 = vld [vmem:[#allocation5 + $0x40] sm:$0xff]
        %v1654 = vld [vmem:[#allocation5 + $0x48] sm:$0xff]
        %v1655 = vld [vmem:[#allocation5 + $0x50] sm:$0xff]
        %v1656 = vld [vmem:[#allocation5 + $0x58] sm:$0xff]
        %v1657 = vld [vmem:[#allocation5 + $0x60] sm:$0xff]
        %v1658 = vld [vmem:[#allocation5 + $0x68] sm:$0xff]
        %v1659 = vld [vmem:[#allocation5 + $0x70] sm:$0xff]
        %v1660 = vld [vmem:[#allocation5 + $0x78] sm:$0xff]
        %v1661 = vld [vmem:[%s10] sm:$0x3]
        %v1663 = vlaneseq
        %v1664 = vshrl.u32 %v1663, 7
        %v1665 = vsub.s32 0, %v1664
        %v1666 = vrot.slane %v1661, %v1665
        %v1667 = vlaneseq
        %v1668 = vshrl.u32 %v1667, 7
        %v1669 = vsub.s32 1, %v1668
        %v1670 = vrot.slane %v1661, %v1669
        %v1674 = vsel %vm617, %v1644, 0
        %1676 = vmatprep.subr.mxu0 %v1646
        %1677 = vmatpush1.msra.mxu0 %v1645
        %1678 = vmatprep.subr.mxu0 %v1648
        %1679 = vmatpush1.msra.mxu0 %v1647
        %1680 = vmatprep.subr.mxu0 %v1650
        %1681 = vmatpush1.msra.mxu0 %v1649
        %1682 = vmatprep.subr.mxu0 %v1652
        %1683 = vmatpush1.msra.mxu0 %v1651
        %1684 = vmatprep.subr.mxu0 %v1654
        %1685 = vmatpush1.msra.mxu0 %v1653
        %1686 = vmatprep.subr.mxu0 %v1656
        %1687 = vmatpush1.msra.mxu0 %v1655
        %1688 = vmatprep.subr.mxu0 %v1658
        %1689 = vmatpush1.msra.mxu0 %v1657
        %1690 = vmatprep.subr.mxu0 %v1660
        %1691 = vmatpush1.msra.mxu0 %v1659
        %1692 = vmatprep.subr.mxu0 0.0
        %1693 = vmatpush1.msra.mxu0 0.0
        %1694 = vmatprep.subr.mxu0 0.0
        %1695 = vmatpush1.msra.mxu0 0.0
        %1696 = vmatprep.subr.mxu0 0.0
        %1697 = vmatpush1.msra.mxu0 0.0
        %1698 = vmatprep.subr.mxu0 0.0
        %1699 = vmatpush1.msra.mxu0 0.0
        %1700 = vmatprep.subr.mxu0 0.0
        %1701 = vmatpush1.msra.mxu0 0.0
        %1702 = vmatprep.subr.mxu0 0.0
        %1703 = vmatpush1.msra.mxu0 0.0
        %1704 = vmatprep.subr.mxu0 0.0
        %1705 = vmatpush1.msra.mxu0 0.0
        %1706 = vmatprep.subr.mxu0 0.0
        %1707 = vmatpush1.msra.mxu0 0.0
        %1708 = vmatprep.subr.mxu0 0.0
        %1709 = vmatpush1.msra.mxu0 0.0
        %1710 = vmatprep.subr.mxu0 0.0
        %1711 = vmatpush1.msra.mxu0 0.0
        %1712 = vmatprep.subr.mxu0 0.0
        %1713 = vmatpush1.msra.mxu0 0.0
        %1714 = vmatprep.subr.mxu0 0.0
        %1715 = vmatpush1.msra.mxu0 0.0
        %1716 = vmatprep.subr.mxu0 0.0
        %1717 = vmatpush1.msra.mxu0 0.0
        %1718 = vmatprep.subr.mxu0 0.0
        %1719 = vmatpush1.msra.mxu0 0.0
        %1720 = vmatprep.subr.mxu0 0.0
        %1721 = vmatpush1.msra.mxu0 0.0
        %1722 = vmatprep.subr.mxu0 0.0
        %1723 = vmatpush1.msra.mxu0 0.0
        %1724 = vmatprep.subr.mxu0 0.0
        %1725 = vmatpush1.msra.mxu0 0.0
        %1726 = vmatprep.subr.mxu0 0.0
        %1727 = vmatpush1.msra.mxu0 0.0
        %1728 = vmatprep.subr.mxu0 0.0
        %1729 = vmatpush1.msra.mxu0 0.0
        %1730 = vmatprep.subr.mxu0 0.0
        %1731 = vmatpush1.msra.mxu0 0.0
        %1732 = vmatprep.subr.mxu0 0.0
        %1733 = vmatpush1.msra.mxu0 0.0
        %1734 = vmatprep.subr.mxu0 0.0
        %1735 = vmatpush1.msra.mxu0 0.0
        %1736 = vmatprep.subr.mxu0 0.0
        %1737 = vmatpush1.msra.mxu0 0.0
        %1738 = vmatprep.subr.mxu0 0.0
        %1739 = vmatpush1.msra.mxu0 0.0
        %1740 = vmatprep.mubr.f32.mxu0 0.0
        %1741 = vmatmul.mubr.f32.gmra.mrb[0].mxu0 %v1674
        %v1742 = vpop.f32.mrb[0].mxu0
        %v1743 = vadd.f32 %v1666, %v1742
        %v1744 = vpop.f32.mrb[0].mxu0
        %v1745 = vadd.f32 %v1670, %v1744
        %1746 = vdwg.mxu0
        %v1747 = vadd.f32 %v1743, 1.0
        %v1748 = vlaneseq
        %v1749 = vshrl.u32 %v1748, 7
        %v1750 = vsub.s32 0, %v1749
        %v1751 = vrot.slane %v1747, %v1750
        %v1752 = vmul.f32 %v1642, %v1751
        %v1753 = vmul.f32 %v1643, %v1751
        %v1754 = vlaneseq
        %v1755 = vshrl.u32 %v1754, 7
        %v1756 = vsub.s32 0, %v1755
        %v1757 = vrot.slane %v1745, %v1756
        %v1758 = vadd.f32 %v1752, %v1757
        %v1759 = vadd.f32 %v1753, %v1757
        %1760 = vst [vmem:[%s514] sm:$0xff] %v1758
        %1761 = vst [vmem:[%s514 + $0x8] sm:$0xff] %v1759
        %s1762 = sand.u32 %s330, 1
        %s1763 = scalar_lea.sflag [#allocation4], %s1762
        %s1764 = sand.u32 %s330, 1
        %s1765 = smul.addr %s1764, 16
        %s1766 = scalar_lea.vmem [#allocation8], %s1765
        // Predicated region
        $region85: #{tpu_custom_call.1} parent=71 // pred_check
          %p1767 = pneg %p340
        $region86: #{tpu_custom_call.1} parent=71 // pred_check_branch
          %1769 = sbr.rel (%p1767) target = $region88
        $region87: #{tpu_custom_call.1} parent=71 // pred_region
          %s1771 = ssub.s32 256, 256
          %1772 = vsyncadd %s1763, %s1771
          %s1773 = smul.addr %s29, 2
          %s1774 = smul.addr %s1773, 128
          %s1775 = scalar_lea.hbm %s13, %s1774
          %s1776 = sshll.u32 %s1766, 4
          %s1777 = int_to_ptr.vmem [resolvable:$true] %s1776
          %1782 = dma.vmem_to_hbm [thread:$0]  %s1777, 256, %s1775, %s1763, 128, 128, 8
        $region88: #{tpu_custom_call.1} parent=71 // pred_fallthru
          _
      $region72: #{tpu_custom_call.1} parent=5 // pred_fallthru
        _
      %p1783 = scmp.le.s32.totalorder 2, %s24
      // Predicated region
      $region89: #{tpu_custom_call.1} parent=5 // pred_check
        %p1784 = pneg %p1783
      $region90: #{tpu_custom_call.1} parent=5 // pred_check_branch
        %1786 = sbr.rel (%p1784) target = $region92
      $region91: #{tpu_custom_call.1} parent=5 // pred_region
        %s1787 = ssub.s32 %s24, 2
        // Predicated region
        $region93: #{tpu_custom_call.1} parent=91 // pred_check
          %p1788 = pneg %p346
        $region94: #{tpu_custom_call.1} parent=91 // pred_check_branch
          %1790 = sbr.rel (%p1788) target = $region96
        $region95: #{tpu_custom_call.1} parent=91 // pred_region
          %s1791 = sand.u32 %s331, 1
          %s1792 = scalar_lea.sflag [#allocation4], %s1791
          %s1793 = sand.u32 %s331, 1
          %s1794 = smul.addr %s1793, 16
          %s1795 = scalar_lea.vmem [#allocation8], %s1794
          %1796 = dma.done %s1792, 256
        $region96: #{tpu_custom_call.1} parent=91 // pred_fallthru
          _
      $region92: #{tpu_custom_call.1} parent=5 // pred_fallthru
        _
    $region6: #{tpu_custom_call.1} parent=1 // loop_footer
      %s28 = sadd.s32 1, %s24
    $region7: #{tpu_custom_call.1} parent=1 // loop_footer_branch
      %23 = sbr.rel target = $region3
    $region8: #{tpu_custom_call.1} parent=1 // loop_exit
      _
    %1797 = vsyncpa [#allocation3], 1
    %s1798 = scalar_lea.sflag [#allocation3], 1
    %1799 = vsyncpa %s1798, 1
    %1800 = vsyncpa [#allocation6], 1
    %1801 = vsyncpa [#allocation4], 1
    %s1802 = scalar_lea.sflag [#allocation4], 1
    %1803 = vsyncpa %s1802, 1

</llo_original>
